<compile_context>
chip_gen: v6e
topology: v6e:2x2x1
jax: 0.10.0
libtpu: 0.0.40
codegen_flags: <defaults>
</compile_context>

<pallas_src>
import functools

import jax
import jax.numpy as jnp
from jax.experimental import pallas as pl
from jax.experimental.pallas import tpu as pltpu

CHEB_K = 3        # Chebyshev order (assumed; see TODO above). Must be >= 2.
BN_EPS = 1e-5


# ----------------------------------------------------------------------------
# Fused forward-pass kernel (one grid step == G graphs, G*N stacked rows)
# ----------------------------------------------------------------------------
def _fused_chebnet_kernel(lap_ref, x_ref, snorm_ref, rd_ref,
                          emb_w_ref, cheb_w_ref, mlp_w_ref, bias_ref,
                          o_ref, *, n_layers, cheb_k):
    lap = lap_ref[...]            # (GN, GN) bf16 block-diagonal scaled Laplacian
    x = x_ref[...]                # (GN, Din) f32 node features (Din tiny)
    snorm = snorm_ref[...]        # (GN, 1)  f32 graph-norm factor per node

    # embedding_h (in_feat_dropout is identity in eval). in_dim is tiny, keep f32.
    emb_b = bias_ref[0:1, :]                                        # (1, H)
    h = jnp.dot(x, emb_w_ref[...],
                preferred_element_type=jnp.float32) + emb_b         # (GN, H) f32

    # ChebLayers, all resident in VMEM / vregs.  L is small -> Python unroll.
    # (Switch to lax.fori_loop if n_layers / N grow and vregs start spilling.)
    for l in range(n_layers):
        cb = bias_ref[1 + l:2 + l, :]                       # BN-folded conv bias
        cs = bias_ref[1 + n_layers + l:2 + n_layers + l, :]  # BN shift

        # Chebyshev recurrence: T0 = h, T1 = L~ h, T_k = 2 L~ T_{k-1} - T_{k-2}
        # bf16 MXU operands, f32 accumulation.  The K terms accumulate into one
        # f32 accumulator (no lane-axis concatenation).
        t_prev = h
        t_prev_b = h.astype(jnp.bfloat16)
        acc = jnp.dot(t_prev_b, cheb_w_ref[l, 0],
                      preferred_element_type=jnp.float32)
        t_cur = jnp.dot(lap, t_prev_b, preferred_element_type=jnp.float32)
        t_cur_b = t_cur.astype(jnp.bfloat16)
        acc = acc + jnp.dot(t_cur_b, cheb_w_ref[l, 1],
                            preferred_element_type=jnp.float32)
        for k in range(2, cheb_k):
            t_next = (2.0 * jnp.dot(lap, t_cur_b,
                                    preferred_element_type=jnp.float32)
                      - t_prev)
            t_next_b = t_next.astype(jnp.bfloat16)
            acc = acc + jnp.dot(t_next_b, cheb_w_ref[l, k],
                                preferred_element_type=jnp.float32)
            t_prev, t_cur, t_cur_b = t_cur, t_next, t_next_b

        acc = (acc + cb) * snorm + cs      # graph_norm + BN(eval), f32 epilogue
        acc = jnp.maximum(acc, 0.0)        # ReLU
        h = h + acc                        # residual

    # mean readout for all G graphs at once: (G, GN) averaging matrix @ h (MXU).
    hg = jnp.dot(rd_ref[...], h.astype(jnp.bfloat16),
                 preferred_element_type=jnp.float32)                # (G, H)

    # MLPReadout: H -> H/2 -> H/4 -> n_classes, with lane-padded (H, H) weights
    # (zero-padded rows/cols keep the padded lanes exactly zero through ReLU).
    b1 = bias_ref[1 + 2 * n_layers:2 + 2 * n_layers, :]
    b2 = bias_ref[2 + 2 * n_layers:3 + 2 * n_layers, :]
    b3 = bias_ref[3 + 2 * n_layers:4 + 2 * n_layers, :]
    y = jnp.maximum(jnp.dot(hg.astype(jnp.bfloat16), mlp_w_ref[0],
                            preferred_element_type=jnp.float32) + b1, 0.0)
    y = jnp.maximum(jnp.dot(y.astype(jnp.bfloat16), mlp_w_ref[1],
                            preferred_element_type=jnp.float32) + b2, 0.0)
    y = jnp.dot(y.astype(jnp.bfloat16), mlp_w_ref[2],
                preferred_element_type=jnp.float32) + b3
    o_ref[...] = y[:, :o_ref.shape[-1]].astype(o_ref.dtype)


# ----------------------------------------------------------------------------
# Host wrapper
# ----------------------------------------------------------------------------
def _pick_graphs_per_step(batch, n_nodes, target_rows=128, min_steps=2):
    """Largest divisor G of batch with G*N <= target_rows, preferring >= 2 grid
    steps so v7x's two TensorCores both get work (v5e/v6e have one TC)."""
    assert n_nodes <= target_rows, "graph too large for one row block"
    divisors = [g for g in range(1, batch + 1)
                if batch % g == 0 and g * n_nodes <= target_rows]
    preferred = [g for g in divisors if batch // g >= min_steps]
    return max(preferred) if preferred else max(divisors)


def _pad2d(w, rows, cols):
    out = jnp.zeros((rows, cols), w.dtype)
    return out.at[:w.shape[0], :w.shape[1]].set(w)


def chebnet_forward(params, lap, h, snorm_n, *, target_rows=128):
    """lap:(B,N,N) scaled Laplacian, h:(B,N,in_dim), snorm_n:(B,N,1) -> (B,C).

    target_rows: rows (graphs*nodes) packed per grid step.  128 saturates v5e's
    MXU; 256 half-fills v6e/v7x less but would collapse this small example to a
    single grid step, so 128 with >= 2 parallel steps is used here.
    """
    B, N, in_dim = h.shape
    H = params["emb_w"].shape[1]
    L = len(params["layers"])
    C = params["mlp"][2]["w"].shape[1]

    G = _pick_graphs_per_step(B, N, target_rows)
    steps = B // G
    GN = G * N

    # ---- parameter prep (host, once per trace) ------------------------------
    # Fold BN(eval) scale into Chebyshev weights; (L, K, H, H) bf16.
    cw = jnp.stack([layer["w"] * layer["bn_scale"]
                    for layer in params["layers"]]).astype(jnp.bfloat16)
    # One f32 bias slab: [emb_b, cheb_b*scale (L), bn_shift (L), mlp b1,b2,b3].
    rows = [params["emb_b"]]
    rows += [l["b"] * l["bn_scale"] for l in params["layers"]]
    rows += [l["bn_shift"] for l in params["layers"]]
    rows += [_pad2d(params["mlp"][i]["b"], 1, H) for i in range(3)]
    bias = jnp.concatenate(rows, axis=0).astype(jnp.float32)        # (4+2L, H)
    # One lane-padded bf16 slab for the three MLP weights.
    mlp_w = jnp.stack([_pad2d(params["mlp"][i]["w"], H, H)
                       for i in range(3)]).astype(jnp.bfloat16)     # (3, H, H)
    emb_w = params["emb_w"].astype(jnp.float32)                     # in_dim tiny

    # ---- input prep (host) ---------------------------------------------------
    # Block-diagonal Laplacian: one (GN, GN) tile per grid step, bf16.
    lap_g = lap.reshape(steps, G, N, N).astype(jnp.float32)
    eye = jnp.eye(G, dtype=jnp.float32)
    lap_bd = jnp.einsum("sgij,gh->sgihj", lap_g, eye)
    lap_bd = lap_bd.reshape(steps * GN, GN).astype(jnp.bfloat16)
    x = h.reshape(steps * GN, in_dim).astype(jnp.float32)
    snorm = snorm_n.reshape(steps * GN, 1).astype(jnp.float32)
    # Constant block-averaging readout matrix (mean over each graph's N nodes).
    rd = jnp.kron(jnp.eye(G, dtype=jnp.float32),
                  jnp.full((1, N), 1.0 / N, jnp.float32)).astype(jnp.bfloat16)

    kernel = functools.partial(_fused_chebnet_kernel,
                               n_layers=L, cheb_k=CHEB_K)
    out = pl.pallas_call(
        kernel,
        out_shape=jax.ShapeDtypeStruct((B, C), jnp.float32),
        grid=(steps,),
        in_specs=[
            pl.BlockSpec((GN, GN), lambda i: (i, 0)),               # lap (block-diag)
            pl.BlockSpec((GN, in_dim), lambda i: (i, 0)),           # node features
            pl.BlockSpec((GN, 1), lambda i: (i, 0)),                # snorm_n per node
            pl.BlockSpec((G, GN), lambda i: (0, 0)),                # readout matrix
            pl.BlockSpec((in_dim, H), lambda i: (0, 0)),            # emb_w
            pl.BlockSpec((L, CHEB_K, H, H), lambda i: (0, 0, 0, 0)),  # cheb W (folded)
            pl.BlockSpec((3, H, H), lambda i: (0, 0, 0)),           # mlp W (padded)
            pl.BlockSpec((4 + 2 * L, H), lambda i: (0, 0)),         # bias slab
        ],
        out_specs=pl.BlockSpec((G, C), lambda i: (i, 0)),
        compiler_params=pltpu.CompilerParams(
            dimension_semantics=("parallel",)),
    )(lap_bd, x, snorm, rd, emb_w, cw, mlp_w, bias)
    return out


# ----------------------------------------------------------------------------
# Pure-JAX reference (for correctness check)
# ----------------------------------------------------------------------------
def chebnet_reference(params, lap, h, snorm_n):
    h = h @ params["emb_w"] + params["emb_b"]
    for layer in params["layers"]:
        h_in = h
        t_prev = h
        t_cur = jnp.einsum("bij,bjh->bih", lap, h)
        acc = t_prev @ layer["w"][0] + t_cur @ layer["w"][1]
        for k in range(2, CHEB_K):
            t_next = 2.0 * jnp.einsum("bij,bjh->bih", lap, t_cur) - t_prev
            acc = acc + t_next @ layer["w"][k]
            t_prev, t_cur = t_cur, t_next
        acc = acc + layer["b"]
        acc = acc * snorm_n
        acc = acc * layer["bn_scale"] + layer["bn_shift"]
        acc = jax.nn.relu(acc)
        h = h_in + acc
    hg = jnp.mean(h, axis=1)
    mlp = params["mlp"]
    y = jax.nn.relu(hg @ mlp[0]["w"] + mlp[0]["b"])
    y = jax.nn.relu(y @ mlp[1]["w"] + mlp[1]["b"])
    y = y @ mlp[2]["w"] + mlp[2]["b"]
    return y


# ----------------------------------------------------------------------------
# Params / inputs
# ----------------------------------------------------------------------------
def _to_bf16_grid(w):
    """Round to the bf16 grid (weights are stored/consumed in bf16 by the
    kernel); keeps the f32 reference and the kernel sharing identical values."""
    return w.astype(jnp.bfloat16).astype(jnp.float32)


def init_params(key, in_dim, hidden_dim, n_classes, n_layers):
    ks = jax.random.split(key, 16)
    kidx = iter(range(16))

    def lin_init(k, fan_in, fan_out):
        bound = 1.0 / jnp.sqrt(fan_in)
        kw, kb = jax.random.split(k)
        w = jax.random.uniform(kw, (fan_in, fan_out), jnp.float32, -bound, bound)
        b = jax.random.uniform(kb, (1, fan_out), jnp.float32, -bound, bound)
        return w, b

    params = {}
    params["emb_w"], params["emb_b"] = lin_init(ks[next(kidx)], in_dim, hidden_dim)

    # BatchNorm1d eval with default running stats (mean=0, var=1, gamma=1, beta=0)
    bn_scale = jnp.full((1, hidden_dim), 1.0 / jnp.sqrt(1.0 + BN_EPS), jnp.float32)
    bn_shift = jnp.zeros((1, hidden_dim), jnp.float32)

    layers = []
    for _ in range(n_layers):
        k = ks[next(kidx)]
        bound = 1.0 / jnp.sqrt(hidden_dim)
        kw, kb = jax.random.split(k)
        w = jax.random.uniform(kw, (CHEB_K, hidden_dim, hidden_dim),
                               jnp.float32, -bound, bound)
        b = jax.random.uniform(kb, (1, hidden_dim), jnp.float32, -bound, bound)
        layers.append({"w": _to_bf16_grid(w), "b": b,
                       "bn_scale": bn_scale, "bn_shift": bn_shift})
    params["layers"] = layers

    # MLPReadout: hidden -> hidden//2 -> hidden//4 -> n_classes
    dims = [hidden_dim, hidden_dim // 2, hidden_dim // 4, n_classes]
    mlp = []
    for i in range(3):
        w, b = lin_init(ks[next(kidx)], dims[i], dims[i + 1])
        mlp.append({"w": _to_bf16_grid(w), "b": b})
    params["mlp"] = mlp
    return params


def build_graph_batch(key, batch, n_nodes):
    """Random symmetric graphs -> scaled Laplacian L~ = -D^{-1/2} A D^{-1/2}
    (lambda_max = 2), plus snorm_n = 1/sqrt(num_nodes)."""
    a = jax.random.bernoulli(key, 0.3, (batch, n_nodes, n_nodes)).astype(jnp.float32)
    a = jnp.triu(a, 1)
    a = a + jnp.swapaxes(a, 1, 2)                       # symmetric, no self loops
    deg = jnp.maximum(jnp.sum(a, axis=-1), 1.0)         # (B, N), avoid div-by-0
    d_inv_sqrt = 1.0 / jnp.sqrt(deg)
    lap = -a * d_inv_sqrt[:, :, None] * d_inv_sqrt[:, None, :]
    lap = _to_bf16_grid(lap)                            # kernel consumes bf16 lap
    snorm_n = jnp.full((batch, n_nodes, 1), 1.0 / jnp.sqrt(n_nodes), jnp.float32)
    return lap, snorm_n


if __name__ == "__main__":
    # 16 graphs of 16 nodes -> 8 graphs per grid step (128 rows), 2 parallel steps.
    B, N = 16, 16
    IN_DIM, HIDDEN, N_CLASSES, N_LAYERS = 4, 32, 10, 2

    key = jax.random.PRNGKey(0)
    k_param, k_graph, k_feat = jax.random.split(key, 3)

    params = init_params(k_param, IN_DIM, HIDDEN, N_CLASSES, N_LAYERS)
    lap, snorm_n = build_graph_batch(k_graph, B, N)
    h = jax.random.normal(k_feat, (B, N, IN_DIM), jnp.float32)

    logits = chebnet_forward(params, lap, h, snorm_n)
    jax.block_until_ready(logits)
    assert logits.shape == (B, N_CLASSES)

    ref = chebnet_reference(params, lap, h, snorm_n)
    # bf16 MXU operands (with f32 accumulation) vs. the f32 reference: the
    # 1e-3 tolerance of the all-f32 version is loosened accordingly.
    assert jnp.allclose(logits, ref, atol=2e-2, rtol=2e-2), (
        f"max abs diff {jnp.max(jnp.abs(logits - ref))}")

    print("KERNEL_OK")
</pallas_src>

<mosaic_0001>
module attributes {stable_mosaic.version = 11 : i64} {
  func.func @_fused_chebnet_kernel(%arg0: i32, %arg1: memref<128x128xbf16, #tpu.memory_space<vmem>>, %arg2: memref<128x4xf32, #tpu.memory_space<vmem>>, %arg3: memref<128x1xf32, #tpu.memory_space<vmem>>, %arg4: memref<8x128xbf16, #tpu.memory_space<vmem>>, %arg5: memref<4x32xf32, #tpu.memory_space<vmem>>, %arg6: memref<2x3x32x32xbf16, #tpu.memory_space<vmem>>, %arg7: memref<3x32x32xbf16, #tpu.memory_space<vmem>>, %arg8: memref<8x32xf32, #tpu.memory_space<vmem>>, %arg9: memref<8x10xf32, #tpu.memory_space<vmem>>) attributes {dimension_semantics = [#tpu.dimension_semantics<parallel>], iteration_bounds = array<i64: 2>, scalar_prefetch = 0 : i64, scratch_operands = 0 : i64, tpu.core_type = #tpu.core_type<tc>, window_params = [{transform_indices = @transform_0, window_bounds = array<i64: 128, 128>}, {transform_indices = @transform_1, window_bounds = array<i64: 128, 4>}, {transform_indices = @transform_2, window_bounds = array<i64: 128, 1>}, {pipeline_mode = #tpu.pipeline_mode<synchronous>, transform_indices = @transform_3, window_bounds = array<i64: 8, 128>}, {pipeline_mode = #tpu.pipeline_mode<synchronous>, transform_indices = @transform_4, window_bounds = array<i64: 4, 32>}, {pipeline_mode = #tpu.pipeline_mode<synchronous>, transform_indices = @transform_5, window_bounds = array<i64: 2, 3, 32, 32>}, {pipeline_mode = #tpu.pipeline_mode<synchronous>, transform_indices = @transform_6, window_bounds = array<i64: 3, 32, 32>}, {pipeline_mode = #tpu.pipeline_mode<synchronous>, transform_indices = @transform_7, window_bounds = array<i64: 8, 32>}, {transform_indices = @transform_8, window_bounds = array<i64: 8, 10>}]} {
    %c0 = arith.constant 0 : index
    %c0_0 = arith.constant 0 : index
    %0 = vector.load %arg1[%c0, %c0_0] : memref<128x128xbf16, #tpu.memory_space<vmem>>, vector<128x128xbf16>
    %c0_1 = arith.constant 0 : index
    %c0_2 = arith.constant 0 : index
    %1 = vector.load %arg2[%c0_1, %c0_2] : memref<128x4xf32, #tpu.memory_space<vmem>>, vector<128x4xf32>
    %c0_3 = arith.constant 0 : index
    %c0_4 = arith.constant 0 : index
    %2 = vector.load %arg3[%c0_3, %c0_4] : memref<128x1xf32, #tpu.memory_space<vmem>>, vector<128x1xf32>
    %c0_5 = arith.constant 0 : index
    %c0_6 = arith.constant 0 : index
    %3 = vector.load %arg8[%c0_5, %c0_6] : memref<8x32xf32, #tpu.memory_space<vmem>>, vector<1x32xf32>
    %c0_7 = arith.constant 0 : index
    %c0_8 = arith.constant 0 : index
    %4 = vector.load %arg5[%c0_7, %c0_8] : memref<4x32xf32, #tpu.memory_space<vmem>>, vector<4x32xf32>
    %cst = arith.constant dense<0.000000e+00> : vector<128x32xf32>
    %5 = tpu.matmul %1, %4, %cst {dimension_numbers = #tpu.dot_dimension_numbers<[1], [0], [0], [1], [0, 0, 1, 1], [], []>} : vector<128x4xf32>, vector<4x32xf32>, vector<128x32xf32> -> vector<128x32xf32>
    %6 = vector.broadcast %3 : vector<1x32xf32> to vector<128x32xf32>
    %7 = arith.addf %5, %6 : vector<128x32xf32>
    %c1 = arith.constant 1 : index
    %c0_9 = arith.constant 0 : index
    %8 = vector.load %arg8[%c1, %c0_9] : memref<8x32xf32, #tpu.memory_space<vmem>>, vector<1x32xf32>
    %c3 = arith.constant 3 : index
    %c0_10 = arith.constant 0 : index
    %9 = vector.load %arg8[%c3, %c0_10] : memref<8x32xf32, #tpu.memory_space<vmem>>, vector<1x32xf32>
    %10 = arith.truncf %7 : vector<128x32xf32> to vector<128x32xbf16>
    %c0_11 = arith.constant 0 : index
    %c0_12 = arith.constant 0 : index
    %c0_13 = arith.constant 0 : index
    %c0_14 = arith.constant 0 : index
    %11 = vector.load %arg6[%c0_11, %c0_12, %c0_13, %c0_14] : memref<2x3x32x32xbf16, #tpu.memory_space<vmem>>, vector<1x1x32x32xbf16>
    %12 = vector.shape_cast %11 : vector<1x1x32x32xbf16> to vector<32x32xbf16>
    %cst_15 = arith.constant dense<0.000000e+00> : vector<128x32xf32>
    %13 = tpu.matmul %10, %12, %cst_15 {dimension_numbers = #tpu.dot_dimension_numbers<[1], [0], [0], [1], [0, 0, 1, 1], [], []>} : vector<128x32xbf16>, vector<32x32xbf16>, vector<128x32xf32> -> vector<128x32xf32>
    %cst_16 = arith.constant dense<0.000000e+00> : vector<128x32xf32>
    %14 = tpu.matmul %0, %10, %cst_16 {dimension_numbers = #tpu.dot_dimension_numbers<[1], [0], [0], [1], [0, 0, 1, 1], [], []>} : vector<128x128xbf16>, vector<128x32xbf16>, vector<128x32xf32> -> vector<128x32xf32>
    %15 = arith.truncf %14 : vector<128x32xf32> to vector<128x32xbf16>
    %c0_17 = arith.constant 0 : index
    %c1_18 = arith.constant 1 : index
    %c0_19 = arith.constant 0 : index
    %c0_20 = arith.constant 0 : index
    %16 = vector.load %arg6[%c0_17, %c1_18, %c0_19, %c0_20] : memref<2x3x32x32xbf16, #tpu.memory_space<vmem>>, vector<1x1x32x32xbf16>
    %17 = vector.shape_cast %16 : vector<1x1x32x32xbf16> to vector<32x32xbf16>
    %cst_21 = arith.constant dense<0.000000e+00> : vector<128x32xf32>
    %18 = tpu.matmul %15, %17, %cst_21 {dimension_numbers = #tpu.dot_dimension_numbers<[1], [0], [0], [1], [0, 0, 1, 1], [], []>} : vector<128x32xbf16>, vector<32x32xbf16>, vector<128x32xf32> -> vector<128x32xf32>
    %19 = arith.addf %13, %18 : vector<128x32xf32>
    %cst_22 = arith.constant dense<0.000000e+00> : vector<128x32xf32>
    %20 = tpu.matmul %0, %15, %cst_22 {dimension_numbers = #tpu.dot_dimension_numbers<[1], [0], [0], [1], [0, 0, 1, 1], [], []>} : vector<128x128xbf16>, vector<128x32xbf16>, vector<128x32xf32> -> vector<128x32xf32>
    %cst_23 = arith.constant 2.000000e+00 : f32
    %21 = vector.broadcast %cst_23 : f32 to vector<128x32xf32>
    %22 = arith.mulf %21, %20 : vector<128x32xf32>
    %23 = arith.subf %22, %7 : vector<128x32xf32>
    %24 = arith.truncf %23 : vector<128x32xf32> to vector<128x32xbf16>
    %c0_24 = arith.constant 0 : index
    %c2 = arith.constant 2 : index
    %c0_25 = arith.constant 0 : index
    %c0_26 = arith.constant 0 : index
    %25 = vector.load %arg6[%c0_24, %c2, %c0_25, %c0_26] : memref<2x3x32x32xbf16, #tpu.memory_space<vmem>>, vector<1x1x32x32xbf16>
    %26 = vector.shape_cast %25 : vector<1x1x32x32xbf16> to vector<32x32xbf16>
    %cst_27 = arith.constant dense<0.000000e+00> : vector<128x32xf32>
    %27 = tpu.matmul %24, %26, %cst_27 {dimension_numbers = #tpu.dot_dimension_numbers<[1], [0], [0], [1], [0, 0, 1, 1], [], []>} : vector<128x32xbf16>, vector<32x32xbf16>, vector<128x32xf32> -> vector<128x32xf32>
    %28 = arith.addf %19, %27 : vector<128x32xf32>
    %29 = vector.broadcast %8 : vector<1x32xf32> to vector<128x32xf32>
    %30 = arith.addf %28, %29 : vector<128x32xf32>
    %31 = vector.broadcast %2 : vector<128x1xf32> to vector<128x32xf32>
    %32 = arith.mulf %30, %31 : vector<128x32xf32>
    %33 = vector.broadcast %9 : vector<1x32xf32> to vector<128x32xf32>
    %34 = arith.addf %32, %33 : vector<128x32xf32>
    %cst_28 = arith.constant 0.000000e+00 : f32
    %35 = vector.broadcast %cst_28 : f32 to vector<128x32xf32>
    %36 = arith.maximumf %34, %35 : vector<128x32xf32>
    %37 = arith.addf %7, %36 : vector<128x32xf32>
    %c2_29 = arith.constant 2 : index
    %c0_30 = arith.constant 0 : index
    %38 = vector.load %arg8[%c2_29, %c0_30] : memref<8x32xf32, #tpu.memory_space<vmem>>, vector<1x32xf32>
    %c4 = arith.constant 4 : index
    %c0_31 = arith.constant 0 : index
    %39 = vector.load %arg8[%c4, %c0_31] : memref<8x32xf32, #tpu.memory_space<vmem>>, vector<1x32xf32>
    %40 = arith.truncf %37 : vector<128x32xf32> to vector<128x32xbf16>
    %c1_32 = arith.constant 1 : index
    %c0_33 = arith.constant 0 : index
    %c0_34 = arith.constant 0 : index
    %c0_35 = arith.constant 0 : index
    %41 = vector.load %arg6[%c1_32, %c0_33, %c0_34, %c0_35] : memref<2x3x32x32xbf16, #tpu.memory_space<vmem>>, vector<1x1x32x32xbf16>
    %42 = vector.shape_cast %41 : vector<1x1x32x32xbf16> to vector<32x32xbf16>
    %cst_36 = arith.constant dense<0.000000e+00> : vector<128x32xf32>
    %43 = tpu.matmul %40, %42, %cst_36 {dimension_numbers = #tpu.dot_dimension_numbers<[1], [0], [0], [1], [0, 0, 1, 1], [], []>} : vector<128x32xbf16>, vector<32x32xbf16>, vector<128x32xf32> -> vector<128x32xf32>
    %cst_37 = arith.constant dense<0.000000e+00> : vector<128x32xf32>
    %44 = tpu.matmul %0, %40, %cst_37 {dimension_numbers = #tpu.dot_dimension_numbers<[1], [0], [0], [1], [0, 0, 1, 1], [], []>} : vector<128x128xbf16>, vector<128x32xbf16>, vector<128x32xf32> -> vector<128x32xf32>
    %45 = arith.truncf %44 : vector<128x32xf32> to vector<128x32xbf16>
    %c1_38 = arith.constant 1 : index
    %c1_39 = arith.constant 1 : index
    %c0_40 = arith.constant 0 : index
    %c0_41 = arith.constant 0 : index
    %46 = vector.load %arg6[%c1_38, %c1_39, %c0_40, %c0_41] : memref<2x3x32x32xbf16, #tpu.memory_space<vmem>>, vector<1x1x32x32xbf16>
    %47 = vector.shape_cast %46 : vector<1x1x32x32xbf16> to vector<32x32xbf16>
    %cst_42 = arith.constant dense<0.000000e+00> : vector<128x32xf32>
    %48 = tpu.matmul %45, %47, %cst_42 {dimension_numbers = #tpu.dot_dimension_numbers<[1], [0], [0], [1], [0, 0, 1, 1], [], []>} : vector<128x32xbf16>, vector<32x32xbf16>, vector<128x32xf32> -> vector<128x32xf32>
    %49 = arith.addf %43, %48 : vector<128x32xf32>
    %cst_43 = arith.constant dense<0.000000e+00> : vector<128x32xf32>
    %50 = tpu.matmul %0, %45, %cst_43 {dimension_numbers = #tpu.dot_dimension_numbers<[1], [0], [0], [1], [0, 0, 1, 1], [], []>} : vector<128x128xbf16>, vector<128x32xbf16>, vector<128x32xf32> -> vector<128x32xf32>
    %cst_44 = arith.constant 2.000000e+00 : f32
    %51 = vector.broadcast %cst_44 : f32 to vector<128x32xf32>
    %52 = arith.mulf %51, %50 : vector<128x32xf32>
    %53 = arith.subf %52, %37 : vector<128x32xf32>
    %54 = arith.truncf %53 : vector<128x32xf32> to vector<128x32xbf16>
    %c1_45 = arith.constant 1 : index
    %c2_46 = arith.constant 2 : index
    %c0_47 = arith.constant 0 : index
    %c0_48 = arith.constant 0 : index
    %55 = vector.load %arg6[%c1_45, %c2_46, %c0_47, %c0_48] : memref<2x3x32x32xbf16, #tpu.memory_space<vmem>>, vector<1x1x32x32xbf16>
    %56 = vector.shape_cast %55 : vector<1x1x32x32xbf16> to vector<32x32xbf16>
    %cst_49 = arith.constant dense<0.000000e+00> : vector<128x32xf32>
    %57 = tpu.matmul %54, %56, %cst_49 {dimension_numbers = #tpu.dot_dimension_numbers<[1], [0], [0], [1], [0, 0, 1, 1], [], []>} : vector<128x32xbf16>, vector<32x32xbf16>, vector<128x32xf32> -> vector<128x32xf32>
    %58 = arith.addf %49, %57 : vector<128x32xf32>
    %59 = vector.broadcast %38 : vector<1x32xf32> to vector<128x32xf32>
    %60 = arith.addf %58, %59 : vector<128x32xf32>
    %61 = vector.broadcast %2 : vector<128x1xf32> to vector<128x32xf32>
    %62 = arith.mulf %60, %61 : vector<128x32xf32>
    %63 = vector.broadcast %39 : vector<1x32xf32> to vector<128x32xf32>
    %64 = arith.addf %62, %63 : vector<128x32xf32>
    %cst_50 = arith.constant 0.000000e+00 : f32
    %65 = vector.broadcast %cst_50 : f32 to vector<128x32xf32>
    %66 = arith.maximumf %64, %65 : vector<128x32xf32>
    %67 = arith.addf %37, %66 : vector<128x32xf32>
    %c0_51 = arith.constant 0 : index
    %c0_52 = arith.constant 0 : index
    %68 = vector.load %arg4[%c0_51, %c0_52] : memref<8x128xbf16, #tpu.memory_space<vmem>>, vector<8x128xbf16>
    %69 = arith.truncf %67 : vector<128x32xf32> to vector<128x32xbf16>
    %cst_53 = arith.constant dense<0.000000e+00> : vector<8x32xf32>
    %70 = tpu.matmul %68, %69, %cst_53 {dimension_numbers = #tpu.dot_dimension_numbers<[1], [0], [0], [1], [0, 0, 1, 1], [], []>} : vector<8x128xbf16>, vector<128x32xbf16>, vector<8x32xf32> -> vector<8x32xf32>
    %c5 = arith.constant 5 : index
    %c0_54 = arith.constant 0 : index
    %71 = vector.load %arg8[%c5, %c0_54] : memref<8x32xf32, #tpu.memory_space<vmem>>, vector<1x32xf32>
    %c6 = arith.constant 6 : index
    %c0_55 = arith.constant 0 : index
    %72 = vector.load %arg8[%c6, %c0_55] : memref<8x32xf32, #tpu.memory_space<vmem>>, vector<1x32xf32>
    %c7 = arith.constant 7 : index
    %c0_56 = arith.constant 0 : index
    %73 = vector.load %arg8[%c7, %c0_56] : memref<8x32xf32, #tpu.memory_space<vmem>>, vector<1x32xf32>
    %74 = arith.truncf %70 : vector<8x32xf32> to vector<8x32xbf16>
    %c0_57 = arith.constant 0 : index
    %c0_58 = arith.constant 0 : index
    %c0_59 = arith.constant 0 : index
    %75 = vector.load %arg7[%c0_57, %c0_58, %c0_59] : memref<3x32x32xbf16, #tpu.memory_space<vmem>>, vector<1x32x32xbf16>
    %76 = vector.shape_cast %75 : vector<1x32x32xbf16> to vector<32x32xbf16>
    %cst_60 = arith.constant dense<0.000000e+00> : vector<8x32xf32>
    %77 = tpu.matmul %74, %76, %cst_60 {dimension_numbers = #tpu.dot_dimension_numbers<[1], [0], [0], [1], [0, 0, 1, 1], [], []>} : vector<8x32xbf16>, vector<32x32xbf16>, vector<8x32xf32> -> vector<8x32xf32>
    %78 = vector.broadcast %71 : vector<1x32xf32> to vector<8x32xf32>
    %79 = arith.addf %77, %78 : vector<8x32xf32>
    %cst_61 = arith.constant 0.000000e+00 : f32
    %80 = vector.broadcast %cst_61 : f32 to vector<8x32xf32>
    %81 = arith.maximumf %79, %80 : vector<8x32xf32>
    %82 = arith.truncf %81 : vector<8x32xf32> to vector<8x32xbf16>
    %c1_62 = arith.constant 1 : index
    %c0_63 = arith.constant 0 : index
    %c0_64 = arith.constant 0 : index
    %83 = vector.load %arg7[%c1_62, %c0_63, %c0_64] : memref<3x32x32xbf16, #tpu.memory_space<vmem>>, vector<1x32x32xbf16>
    %84 = vector.shape_cast %83 : vector<1x32x32xbf16> to vector<32x32xbf16>
    %cst_65 = arith.constant dense<0.000000e+00> : vector<8x32xf32>
    %85 = tpu.matmul %82, %84, %cst_65 {dimension_numbers = #tpu.dot_dimension_numbers<[1], [0], [0], [1], [0, 0, 1, 1], [], []>} : vector<8x32xbf16>, vector<32x32xbf16>, vector<8x32xf32> -> vector<8x32xf32>
    %86 = vector.broadcast %72 : vector<1x32xf32> to vector<8x32xf32>
    %87 = arith.addf %85, %86 : vector<8x32xf32>
    %cst_66 = arith.constant 0.000000e+00 : f32
    %88 = vector.broadcast %cst_66 : f32 to vector<8x32xf32>
    %89 = arith.maximumf %87, %88 : vector<8x32xf32>
    %90 = arith.truncf %89 : vector<8x32xf32> to vector<8x32xbf16>
    %c2_67 = arith.constant 2 : index
    %c0_68 = arith.constant 0 : index
    %c0_69 = arith.constant 0 : index
    %91 = vector.load %arg7[%c2_67, %c0_68, %c0_69] : memref<3x32x32xbf16, #tpu.memory_space<vmem>>, vector<1x32x32xbf16>
    %92 = vector.shape_cast %91 : vector<1x32x32xbf16> to vector<32x32xbf16>
    %cst_70 = arith.constant dense<0.000000e+00> : vector<8x32xf32>
    %93 = tpu.matmul %90, %92, %cst_70 {dimension_numbers = #tpu.dot_dimension_numbers<[1], [0], [0], [1], [0, 0, 1, 1], [], []>} : vector<8x32xbf16>, vector<32x32xbf16>, vector<8x32xf32> -> vector<8x32xf32>
    %94 = vector.broadcast %73 : vector<1x32xf32> to vector<8x32xf32>
    %95 = arith.addf %93, %94 : vector<8x32xf32>
    %96 = vector.extract_strided_slice %95 {offsets = [0, 0], sizes = [8, 10], strides = [1, 1]} : vector<8x32xf32> to vector<8x10xf32>
    %c0_71 = arith.constant 0 : index
    %c0_72 = arith.constant 0 : index
    %97 = vector.load %arg9[%c0_71, %c0_72] : memref<8x10xf32, #tpu.memory_space<vmem>>, vector<8x10xf32>
    tpu.vector_store %arg9[%c0_71, %c0_72], %96 {strides = array<i32>} : memref<8x10xf32, #tpu.memory_space<vmem>>, vector<8x10xf32>,
    return
  }
  func.func @transform_0(%arg0: i32) -> (i32, i32) {
    %c0_i32 = arith.constant 0 : i32
    %c0_i32_0 = arith.constant 0 : i32
    return %arg0, %c0_i32 : i32, i32
  }
  func.func @transform_1(%arg0: i32) -> (i32, i32) {
    %c0_i32 = arith.constant 0 : i32
    %c0_i32_0 = arith.constant 0 : i32
    return %arg0, %c0_i32 : i32, i32
  }
  func.func @transform_2(%arg0: i32) -> (i32, i32) {
    %c0_i32 = arith.constant 0 : i32
    %c0_i32_0 = arith.constant 0 : i32
    return %arg0, %c0_i32 : i32, i32
  }
  func.func @transform_3(%arg0: i32) -> (i32, i32) {
    %c0_i32 = arith.constant 0 : i32
    %c0_i32_0 = arith.constant 0 : i32
    %c0_i32_1 = arith.constant 0 : i32
    return %c0_i32, %c0_i32_0 : i32, i32
  }
  func.func @transform_4(%arg0: i32) -> (i32, i32) {
    %c0_i32 = arith.constant 0 : i32
    %c0_i32_0 = arith.constant 0 : i32
    %c0_i32_1 = arith.constant 0 : i32
    return %c0_i32, %c0_i32_0 : i32, i32
  }
  func.func @transform_5(%arg0: i32) -> (i32, i32, i32, i32) {
    %c0_i32 = arith.constant 0 : i32
    %c0_i32_0 = arith.constant 0 : i32
    %c0_i32_1 = arith.constant 0 : i32
    %c0_i32_2 = arith.constant 0 : i32
    %c0_i32_3 = arith.constant 0 : i32
    return %c0_i32, %c0_i32_0, %c0_i32_1, %c0_i32_2 : i32, i32, i32, i32
  }
  func.func @transform_6(%arg0: i32) -> (i32, i32, i32) {
    %c0_i32 = arith.constant 0 : i32
    %c0_i32_0 = arith.constant 0 : i32
    %c0_i32_1 = arith.constant 0 : i32
    %c0_i32_2 = arith.constant 0 : i32
    return %c0_i32, %c0_i32_0, %c0_i32_1 : i32, i32, i32
  }
  func.func @transform_7(%arg0: i32) -> (i32, i32) {
    %c0_i32 = arith.constant 0 : i32
    %c0_i32_0 = arith.constant 0 : i32
    %c0_i32_1 = arith.constant 0 : i32
    return %c0_i32, %c0_i32_0 : i32, i32
  }
  func.func @transform_8(%arg0: i32) -> (i32, i32) {
    %c0_i32 = arith.constant 0 : i32
    %c0_i32_0 = arith.constant 0 : i32
    return %arg0, %c0_i32 : i32, i32
  }
}

</mosaic_0001>

<llo_original>
// kernel: tpu_custom_call.1
$region0: #{tpu_custom_call.1}
  #allocation0 [shape = 'u32[]', space=smem, size = 0x4, offset = 0x4, fixed_abs, tag = 'smem constant byte address 0x4 - core index']
  #allocation1 [shape = 'u32[144,128]{1,0:T(1,128)}', space=vmem, size = 0x12000, scoped, tag = 'internal scratch']
  %s0 = inlined_call_operand.vmem [shape: bf16[256,128], index: 0, kind: input, shape index: {}]
  %s1 = inlined_call_operand.vmem [shape: f32[256,4], index: 1, kind: input, shape index: {}]
  %s2 = inlined_call_operand.vmem [shape: f32[256,1], index: 2, kind: input, shape index: {}]
  %s3 = inlined_call_operand.vmem [shape: bf16[8,128], index: 3, kind: input, shape index: {}]
  %s4 = inlined_call_operand.vmem [shape: f32[4,32], index: 4, kind: input, shape index: {}]
  %s5 = inlined_call_operand.vmem [shape: bf16[2,3,32,32], index: 5, kind: input, shape index: {}]
  %s6 = inlined_call_operand.vmem [shape: bf16[3,32,32], index: 6, kind: input, shape index: {}]
  %s7 = inlined_call_operand.vmem [shape: f32[8,32], index: 7, kind: input, shape index: {}]
  %s8 = inlined_call_operand.hbm [shape: f32[16,10], index: 8, kind: output, shape index: {}]
  %s9 = sld [smem:[#allocation0]]
  $region65: #{tpu_custom_call.1} parent=0
    _
  %s11 = ssub.s32 1, %s9
  %s12 = scalar_select 0, %s11, %s9
  $region1: #{tpu_custom_call.1} parent=0
    #allocation2 [shape = 'u8[8192]{0}', space=vmem, size = 0x2000, scoped, tag = 'output window, operand 0']
    #allocation3 [shape = 's32[2]{0}', space=sflag, size = 0x8, scoped, tag = 'scoped memory for tpu_custom_call.1']
    %13 = vsyncpa [#allocation3], 0
    %s14 = scalar_lea.sflag [#allocation3], 1
    %15 = vsyncpa %s14, 0
    loop: start=0, step=1, limit=4
    $region2: #{tpu_custom_call.1} parent=1 // loop_pre_header
      _
    $region3: #{tpu_custom_call.1} parent=1 // loop_header
      %s17 = sphi 0, %s21
      %p18 = scmp.ge.s32.totalorder %s17, 4
      %s27 = sphi 0, %s29
      %s30 = sphi 0, %s27
      %s31 = sphi 0, %s30
      %s47 = sphi 0, %s31
      %s53 = sphi 0, %s55
      %s56 = sphi 0, %s53
      %s57 = sphi 0, %s56
      %s73 = sphi 0, %s57
      %s79 = sphi 0, %s81
      %s82 = sphi 0, %s79
      %s83 = sphi 0, %s82
      %s99 = sphi 0, %s83
      %s103 = sphi 0, %s103
      %s105 = sphi 0, %s103
      %s106 = sphi 0, %s105
      %s120 = sphi 0, %s106
      %s124 = sphi 0, %s124
      %s126 = sphi 0, %s124
      %s127 = sphi 0, %s126
      %s141 = sphi 0, %s127
      %s145 = sphi 0, %s145
      %s147 = sphi 0, %s145
      %s148 = sphi 0, %s147
      %s162 = sphi 0, %s148
      %s166 = sphi 0, %s166
      %s168 = sphi 0, %s166
      %s169 = sphi 0, %s168
      %s183 = sphi 0, %s169
      %s187 = sphi 0, %s187
      %s189 = sphi 0, %s187
      %s190 = sphi 0, %s189
      %s204 = sphi 0, %s190
      %s210 = sphi 0, %s212
      %s213 = sphi 0, %s210
      %s214 = sphi 0, %s213
      %s230 = sphi 0, %s214
    $region4: #{tpu_custom_call.1} parent=1 // loop_header_branch
      %20 = sbr.rel (%p18) target = $region8
    $region5: #{tpu_custom_call.1} parent=1 // loop_body
      %s22 = ssub.s32 %s17, 1
      %s23 = ssub.s32 %s17, 2
      %s24 = sadd.s32 %s17, 1
      %s25 = ssub.s32 %s17, %s24
      %p26 = scmp.eq.s32.totalorder %s25, 0
      %s28 = sadd.s32 %s27, 1
      %s29 = scalar_select %p26, %s27, %s28
      %p32 = pneg %p26
      %p33 = scmp.eq.s32.totalorder %s17, 1
      %p34 = por %p32, %p33
      %p35 = scmp.ne.s32.totalorder %s27, %s30
      %p36 = scmp.eq.s32.totalorder %s17, 0
      %p37 = por %p35, %p36
      %p38 = scmp.ne.s32.totalorder %s27, %s30
      %p39 = scmp.eq.s32.totalorder %s22, 1
      %p40 = por %p38, %p39
      %p41 = scmp.ne.s32.totalorder %s30, %s31
      %p42 = scmp.eq.s32.totalorder %s22, 0
      %p43 = por %p41, %p42
      %p44 = scmp.ne.s32.totalorder %s30, %s31
      %p45 = scmp.eq.s32.totalorder %s23, 1
      %p46 = por %p44, %p45
      %p48 = scmp.ne.s32.totalorder %s31, %s47
      %p49 = scmp.eq.s32.totalorder %s23, 0
      %p50 = por %p48, %p49
      %s51 = ssub.s32 %s17, %s24
      %p52 = scmp.eq.s32.totalorder %s51, 0
      %s54 = sadd.s32 %s53, 1
      %s55 = scalar_select %p52, %s53, %s54
      %p58 = pneg %p52
      %p59 = scmp.eq.s32.totalorder %s17, 1
      %p60 = por %p58, %p59
      %p61 = scmp.ne.s32.totalorder %s53, %s56
      %p62 = scmp.eq.s32.totalorder %s17, 0
      %p63 = por %p61, %p62
      %p64 = scmp.ne.s32.totalorder %s53, %s56
      %p65 = scmp.eq.s32.totalorder %s22, 1
      %p66 = por %p64, %p65
      %p67 = scmp.ne.s32.totalorder %s56, %s57
      %p68 = scmp.eq.s32.totalorder %s22, 0
      %p69 = por %p67, %p68
      %p70 = scmp.ne.s32.totalorder %s56, %s57
      %p71 = scmp.eq.s32.totalorder %s23, 1
      %p72 = por %p70, %p71
      %p74 = scmp.ne.s32.totalorder %s57, %s73
      %p75 = scmp.eq.s32.totalorder %s23, 0
      %p76 = por %p74, %p75
      %s77 = ssub.s32 %s17, %s24
      %p78 = scmp.eq.s32.totalorder %s77, 0
      %s80 = sadd.s32 %s79, 1
      %s81 = scalar_select %p78, %s79, %s80
      %p84 = pneg %p78
      %p85 = scmp.eq.s32.totalorder %s17, 1
      %p86 = por %p84, %p85
      %p87 = scmp.ne.s32.totalorder %s79, %s82
      %p88 = scmp.eq.s32.totalorder %s17, 0
      %p89 = por %p87, %p88
      %p90 = scmp.ne.s32.totalorder %s79, %s82
      %p91 = scmp.eq.s32.totalorder %s22, 1
      %p92 = por %p90, %p91
      %p93 = scmp.ne.s32.totalorder %s82, %s83
      %p94 = scmp.eq.s32.totalorder %s22, 0
      %p95 = por %p93, %p94
      %p96 = scmp.ne.s32.totalorder %s82, %s83
      %p97 = scmp.eq.s32.totalorder %s23, 1
      %p98 = por %p96, %p97
      %p100 = scmp.ne.s32.totalorder %s83, %s99
      %p101 = scmp.eq.s32.totalorder %s23, 0
      %p102 = por %p100, %p101
      %s104 = sadd.s32 %s103, 1
      %p107 = scmp.eq.s32.totalorder %s17, 1
      %p108 = scmp.ne.s32.totalorder %s103, %s105
      %p109 = scmp.eq.s32.totalorder %s17, 0
      %p110 = por %p108, %p109
      %p111 = scmp.ne.s32.totalorder %s103, %s105
      %p112 = scmp.eq.s32.totalorder %s22, 1
      %p113 = por %p111, %p112
      %p114 = scmp.ne.s32.totalorder %s105, %s106
      %p115 = scmp.eq.s32.totalorder %s22, 0
      %p116 = por %p114, %p115
      %p117 = scmp.ne.s32.totalorder %s105, %s106
      %p118 = scmp.eq.s32.totalorder %s23, 1
      %p119 = por %p117, %p118
      %p121 = scmp.ne.s32.totalorder %s106, %s120
      %p122 = scmp.eq.s32.totalorder %s23, 0
      %p123 = por %p121, %p122
      %s125 = sadd.s32 %s124, 1
      %p128 = scmp.eq.s32.totalorder %s17, 1
      %p129 = scmp.ne.s32.totalorder %s124, %s126
      %p130 = scmp.eq.s32.totalorder %s17, 0
      %p131 = por %p129, %p130
      %p132 = scmp.ne.s32.totalorder %s124, %s126
      %p133 = scmp.eq.s32.totalorder %s22, 1
      %p134 = por %p132, %p133
      %p135 = scmp.ne.s32.totalorder %s126, %s127
      %p136 = scmp.eq.s32.totalorder %s22, 0
      %p137 = por %p135, %p136
      %p138 = scmp.ne.s32.totalorder %s126, %s127
      %p139 = scmp.eq.s32.totalorder %s23, 1
      %p140 = por %p138, %p139
      %p142 = scmp.ne.s32.totalorder %s127, %s141
      %p143 = scmp.eq.s32.totalorder %s23, 0
      %p144 = por %p142, %p143
      %s146 = sadd.s32 %s145, 1
      %p149 = scmp.eq.s32.totalorder %s17, 1
      %p150 = scmp.ne.s32.totalorder %s145, %s147
      %p151 = scmp.eq.s32.totalorder %s17, 0
      %p152 = por %p150, %p151
      %p153 = scmp.ne.s32.totalorder %s145, %s147
      %p154 = scmp.eq.s32.totalorder %s22, 1
      %p155 = por %p153, %p154
      %p156 = scmp.ne.s32.totalorder %s147, %s148
      %p157 = scmp.eq.s32.totalorder %s22, 0
      %p158 = por %p156, %p157
      %p159 = scmp.ne.s32.totalorder %s147, %s148
      %p160 = scmp.eq.s32.totalorder %s23, 1
      %p161 = por %p159, %p160
      %p163 = scmp.ne.s32.totalorder %s148, %s162
      %p164 = scmp.eq.s32.totalorder %s23, 0
      %p165 = por %p163, %p164
      %s167 = sadd.s32 %s166, 1
      %p170 = scmp.eq.s32.totalorder %s17, 1
      %p171 = scmp.ne.s32.totalorder %s166, %s168
      %p172 = scmp.eq.s32.totalorder %s17, 0
      %p173 = por %p171, %p172
      %p174 = scmp.ne.s32.totalorder %s166, %s168
      %p175 = scmp.eq.s32.totalorder %s22, 1
      %p176 = por %p174, %p175
      %p177 = scmp.ne.s32.totalorder %s168, %s169
      %p178 = scmp.eq.s32.totalorder %s22, 0
      %p179 = por %p177, %p178
      %p180 = scmp.ne.s32.totalorder %s168, %s169
      %p181 = scmp.eq.s32.totalorder %s23, 1
      %p182 = por %p180, %p181
      %p184 = scmp.ne.s32.totalorder %s169, %s183
      %p185 = scmp.eq.s32.totalorder %s23, 0
      %p186 = por %p184, %p185
      %s188 = sadd.s32 %s187, 1
      %p191 = scmp.eq.s32.totalorder %s17, 1
      %p192 = scmp.ne.s32.totalorder %s187, %s189
      %p193 = scmp.eq.s32.totalorder %s17, 0
      %p194 = por %p192, %p193
      %p195 = scmp.ne.s32.totalorder %s187, %s189
      %p196 = scmp.eq.s32.totalorder %s22, 1
      %p197 = por %p195, %p196
      %p198 = scmp.ne.s32.totalorder %s189, %s190
      %p199 = scmp.eq.s32.totalorder %s22, 0
      %p200 = por %p198, %p199
      %p201 = scmp.ne.s32.totalorder %s189, %s190
      %p202 = scmp.eq.s32.totalorder %s23, 1
      %p203 = por %p201, %p202
      %p205 = scmp.ne.s32.totalorder %s190, %s204
      %p206 = scmp.eq.s32.totalorder %s23, 0
      %p207 = por %p205, %p206
      %s208 = ssub.s32 %s17, %s24
      %p209 = scmp.eq.s32.totalorder %s208, 0
      %s211 = sadd.s32 %s210, 1
      %s212 = scalar_select %p209, %s210, %s211
      %p215 = pneg %p209
      %p216 = scmp.eq.s32.totalorder %s17, 1
      %p217 = por %p215, %p216
      %p218 = scmp.ne.s32.totalorder %s210, %s213
      %p219 = scmp.eq.s32.totalorder %s17, 0
      %p220 = por %p218, %p219
      %p221 = scmp.ne.s32.totalorder %s210, %s213
      %p222 = scmp.eq.s32.totalorder %s22, 1
      %p223 = por %p221, %p222
      %p224 = scmp.ne.s32.totalorder %s213, %s214
      %p225 = scmp.eq.s32.totalorder %s22, 0
      %p226 = por %p224, %p225
      %p227 = scmp.ne.s32.totalorder %s213, %s214
      %p228 = scmp.eq.s32.totalorder %s23, 1
      %p229 = por %p227, %p228
      %p231 = scmp.ne.s32.totalorder %s214, %s230
      %p232 = scmp.eq.s32.totalorder %s23, 0
      %p233 = por %p231, %p232
      %p234 = scmp.le.s32.totalorder 1, %s17
      %p235 = scmp.lt.s32.totalorder %s17, 3
      %p236 = pnand %p234, %p235
      %p237 = pneg %p236
      // Predicated region
      $region9: #{tpu_custom_call.1} parent=5 // pred_check
        _
      $region10: #{tpu_custom_call.1} parent=5 // pred_check_branch
        %239 = sbr.rel (%p236) target = $region12
      $region11: #{tpu_custom_call.1} parent=5 // pred_region
        %s240 = ssub.s32 %s17, 1
        // Predicated region
        $region13: #{tpu_custom_call.1} parent=11 // pred_check
          %p241 = pneg %p116
        $region14: #{tpu_custom_call.1} parent=11 // pred_check_branch
          %243 = sbr.rel (%p241) target = $region16
        $region15: #{tpu_custom_call.1} parent=11 // pred_region
          _
        $region16: #{tpu_custom_call.1} parent=11 // pred_fallthru
          _
        // Predicated region
        $region17: #{tpu_custom_call.1} parent=11 // pred_check
          %p244 = pneg %p137
        $region18: #{tpu_custom_call.1} parent=11 // pred_check_branch
          %246 = sbr.rel (%p244) target = $region20
        $region19: #{tpu_custom_call.1} parent=11 // pred_region
          _
        $region20: #{tpu_custom_call.1} parent=11 // pred_fallthru
          _
        // Predicated region
        $region21: #{tpu_custom_call.1} parent=11 // pred_check
          %p247 = pneg %p158
        $region22: #{tpu_custom_call.1} parent=11 // pred_check_branch
          %249 = sbr.rel (%p247) target = $region24
        $region23: #{tpu_custom_call.1} parent=11 // pred_region
          _
        $region24: #{tpu_custom_call.1} parent=11 // pred_fallthru
          _
        // Predicated region
        $region25: #{tpu_custom_call.1} parent=11 // pred_check
          %p250 = pneg %p179
        $region26: #{tpu_custom_call.1} parent=11 // pred_check_branch
          %252 = sbr.rel (%p250) target = $region28
        $region27: #{tpu_custom_call.1} parent=11 // pred_region
          _
        $region28: #{tpu_custom_call.1} parent=11 // pred_fallthru
          _
        // Predicated region
        $region29: #{tpu_custom_call.1} parent=11 // pred_check
          %p253 = pneg %p200
        $region30: #{tpu_custom_call.1} parent=11 // pred_check_branch
          %255 = sbr.rel (%p253) target = $region32
        $region31: #{tpu_custom_call.1} parent=11 // pred_region
          _
        $region32: #{tpu_custom_call.1} parent=11 // pred_fallthru
          _
      $region12: #{tpu_custom_call.1} parent=5 // pred_fallthru
        _
      %p256 = scmp.lt.s32.totalorder %s17, 2
      // Predicated region
      $region33: #{tpu_custom_call.1} parent=5 // pred_check
        %p257 = pneg %p256
      $region34: #{tpu_custom_call.1} parent=5 // pred_check_branch
        %259 = sbr.rel (%p257) target = $region36
      $region35: #{tpu_custom_call.1} parent=5 // pred_region
        // Predicated region
        $region37: #{tpu_custom_call.1} parent=35 // pred_check
          %p260 = pneg %p37
        $region38: #{tpu_custom_call.1} parent=35 // pred_check_branch
          %262 = sbr.rel (%p260) target = $region40
        $region39: #{tpu_custom_call.1} parent=35 // pred_region
          %s263 = smul.u32 16, %s17
          %p264 = scmp.lt.s32.totalorder %s263, 31
          %s265 = scalar_select %p264, %s263, 31
          %s266 = smul.addr %s265, 4
          %s267 = scalar_lea.vmem %s0, %s266
          %s268 = smul.u32 16, %s17
        $region40: #{tpu_custom_call.1} parent=35 // pred_fallthru
          _
        // Predicated region
        $region41: #{tpu_custom_call.1} parent=35 // pred_check
          %p269 = pneg %p63
        $region42: #{tpu_custom_call.1} parent=35 // pred_check_branch
          %271 = sbr.rel (%p269) target = $region44
        $region43: #{tpu_custom_call.1} parent=35 // pred_region
          %s272 = smul.u32 16, %s17
          %p273 = scmp.lt.s32.totalorder %s272, 31
          %s274 = scalar_select %p273, %s272, 31
          %s275 = smul.addr %s274, 8
          %s276 = scalar_lea.vmem %s1, %s275
          %s277 = smul.u32 16, %s17
        $region44: #{tpu_custom_call.1} parent=35 // pred_fallthru
          _
        // Predicated region
        $region45: #{tpu_custom_call.1} parent=35 // pred_check
          %p278 = pneg %p89
        $region46: #{tpu_custom_call.1} parent=35 // pred_check_branch
          %280 = sbr.rel (%p278) target = $region48
        $region47: #{tpu_custom_call.1} parent=35 // pred_region
          %s281 = smul.u32 16, %s17
          %p282 = scmp.lt.s32.totalorder %s281, 31
          %s283 = scalar_select %p282, %s281, 31
          %s284 = smul.addr %s283, 8
          %s285 = scalar_lea.vmem %s2, %s284
          %s286 = smul.u32 16, %s17
        $region48: #{tpu_custom_call.1} parent=35 // pred_fallthru
          _
      $region36: #{tpu_custom_call.1} parent=5 // pred_fallthru
        _
      %p287 = scmp.le.s32.totalorder 1, %s17
      %p288 = scmp.lt.s32.totalorder %s17, 3
      %p289 = pnand %p287, %p288
      %p290 = pneg %p289
      // Predicated region
      $region49: #{tpu_custom_call.1} parent=5 // pred_check
        _
      $region50: #{tpu_custom_call.1} parent=5 // pred_check_branch
        %292 = sbr.rel (%p289) target = $region52
      $region51: #{tpu_custom_call.1} parent=5 // pred_region
        %s293 = ssub.s32 %s17, 1
        %s294 = smul.u32 16, %s22
        %p295 = scmp.lt.s32.totalorder %s294, 31
        %s296 = scalar_select %p295, %s294, 31
        %s297 = smul.addr %s296, 4
        %s298 = scalar_lea.vmem %s0, %s297
        %p299 = pneg %p43
        %p300 = pneg %p40
        %s301 = smul.u32 16, %s22
        %p302 = scmp.lt.s32.totalorder %s301, 31
        %s303 = scalar_select %p302, %s301, 31
        %s304 = smul.addr %s303, 8
        %s305 = scalar_lea.vmem %s1, %s304
        %p306 = pneg %p69
        %p307 = pneg %p66
        %s308 = smul.u32 16, %s22
        %p309 = scmp.lt.s32.totalorder %s308, 31
        %s310 = scalar_select %p309, %s308, 31
        %s311 = smul.addr %s310, 8
        %s312 = scalar_lea.vmem %s2, %s311
        %p313 = pneg %p95
        %p314 = pneg %p92
        %p315 = pneg %p116
        %p316 = pneg %p113
        %p317 = pneg %p137
        %p318 = pneg %p134
        %p319 = pneg %p158
        %p320 = pneg %p155
        %p321 = pneg %p179
        %p322 = pneg %p176
        %p323 = pneg %p200
        %p324 = pneg %p197
        %p325 = pneg %p226
        %p326 = pneg %p223
        %s327 = sand.u32 %s213, 1
        %s328 = scalar_lea.sflag [#allocation3], %s327
        %s329 = sand.u32 %s213, 1
        %s330 = smul.addr %s329, 8
        %s331 = scalar_lea.vmem [#allocation2], %s330
        %s332 = smul.u32 16, %s22
        %p333 = scmp.lt.s32.totalorder %s332, 31
        %s334 = scalar_select %p333, %s332, 31
        %s335 = smul.addr %s334, 4
        %s336 = scalar_lea.vmem %s0, %s335
        %s337 = smul.u32 16, %s22
        %s338 = smul.u32 16, %s22
        %p339 = scmp.lt.s32.totalorder %s338, 31
        %s340 = scalar_select %p339, %s338, 31
        %s341 = smul.addr %s340, 8
        %s342 = scalar_lea.vmem %s1, %s341
        %s343 = smul.u32 16, %s22
        %s344 = smul.u32 16, %s22
        %p345 = scmp.lt.s32.totalorder %s344, 31
        %s346 = scalar_select %p345, %s344, 31
        %s347 = smul.addr %s346, 8
        %s348 = scalar_lea.vmem %s2, %s347
        %s349 = smul.u32 16, %s22
        %v351 = vld [vmem:[%s336] sm:$0xf]
        %v352 = vld [vmem:[%s336 + $0x4] sm:$0xf]
        %v353 = vld [vmem:[%s336 + $0x8] sm:$0xf]
        %v354 = vld [vmem:[%s336 + $0xc] sm:$0xf]
        %v355 = vld [vmem:[%s336 + $0x10] sm:$0xf]
        %v356 = vld [vmem:[%s336 + $0x14] sm:$0xf]
        %v357 = vld [vmem:[%s336 + $0x18] sm:$0xf]
        %v358 = vld [vmem:[%s336 + $0x1c] sm:$0xf]
        %v359 = vld [vmem:[%s336 + $0x20] sm:$0xf]
        %v360 = vld [vmem:[%s336 + $0x24] sm:$0xf]
        %v361 = vld [vmem:[%s336 + $0x28] sm:$0xf]
        %v362 = vld [vmem:[%s336 + $0x2c] sm:$0xf]
        %v363 = vld [vmem:[%s336 + $0x30] sm:$0xf]
        %v364 = vld [vmem:[%s336 + $0x34] sm:$0xf]
        %v365 = vld [vmem:[%s336 + $0x38] sm:$0xf]
        %v366 = vld [vmem:[%s336 + $0x3c] sm:$0xf]
        %v367 = vld [vmem:[%s342] sm:$0xff]
        %v368 = vld [vmem:[%s342 + $0x8] sm:$0xff]
        %v369 = vld [vmem:[%s342 + $0x10] sm:$0xff]
        %v370 = vld [vmem:[%s342 + $0x18] sm:$0xff]
        %v371 = vld [vmem:[%s342 + $0x20] sm:$0xff]
        %v372 = vld [vmem:[%s342 + $0x28] sm:$0xff]
        %v373 = vld [vmem:[%s342 + $0x30] sm:$0xff]
        %v374 = vld [vmem:[%s342 + $0x38] sm:$0xff]
        %v375 = vld [vmem:[%s342 + $0x40] sm:$0xff]
        %v376 = vld [vmem:[%s342 + $0x48] sm:$0xff]
        %v377 = vld [vmem:[%s342 + $0x50] sm:$0xff]
        %v378 = vld [vmem:[%s342 + $0x58] sm:$0xff]
        %v379 = vld [vmem:[%s342 + $0x60] sm:$0xff]
        %v380 = vld [vmem:[%s342 + $0x68] sm:$0xff]
        %v381 = vld [vmem:[%s342 + $0x70] sm:$0xff]
        %v382 = vld [vmem:[%s342 + $0x78] sm:$0xff]
        %v383 = vld [vmem:[%s348] sm:$0xff]
        %v384 = vld [vmem:[%s348 + $0x8] sm:$0xff]
        %v385 = vld [vmem:[%s348 + $0x10] sm:$0xff]
        %v386 = vld [vmem:[%s348 + $0x18] sm:$0xff]
        %v387 = vld [vmem:[%s348 + $0x20] sm:$0xff]
        %v388 = vld [vmem:[%s348 + $0x28] sm:$0xff]
        %v389 = vld [vmem:[%s348 + $0x30] sm:$0xff]
        %v390 = vld [vmem:[%s348 + $0x38] sm:$0xff]
        %v391 = vld [vmem:[%s348 + $0x40] sm:$0xff]
        %v392 = vld [vmem:[%s348 + $0x48] sm:$0xff]
        %v393 = vld [vmem:[%s348 + $0x50] sm:$0xff]
        %v394 = vld [vmem:[%s348 + $0x58] sm:$0xff]
        %v395 = vld [vmem:[%s348 + $0x60] sm:$0xff]
        %v396 = vld [vmem:[%s348 + $0x68] sm:$0xff]
        %v397 = vld [vmem:[%s348 + $0x70] sm:$0xff]
        %v398 = vld [vmem:[%s348 + $0x78] sm:$0xff]
        %v399 = vld [vmem:[%s7] sm:$0x1]
        %v400 = vld [vmem:[%s4] sm:$0xf]
        %v401 = vlaneseq
        %v402 = vshrl.u32 %v401, 7
        %v403 = vsub.s32 0, %v402
        %v404 = vrot.slane %v399, %v403
        %vm405 = vcmask 31744
        %v407 = vsel %vm405, %v367, 0
        %v410 = vsel %vm405, %v368, 0
        %v413 = vsel %vm405, %v369, 0
        %v416 = vsel %vm405, %v370, 0
        %v419 = vsel %vm405, %v371, 0
        %v422 = vsel %vm405, %v372, 0
        %v425 = vsel %vm405, %v373, 0
        %v428 = vsel %vm405, %v374, 0
        %v431 = vsel %vm405, %v375, 0
        %v434 = vsel %vm405, %v376, 0
        %v437 = vsel %vm405, %v377, 0
        %v440 = vsel %vm405, %v378, 0
        %v443 = vsel %vm405, %v379, 0
        %v446 = vsel %vm405, %v380, 0
        %v449 = vsel %vm405, %v381, 0
        %v452 = vsel %vm405, %v382, 0
        %vm454 = vcmask 1043456
        %v456 = vsel %vm454, %v400, 0
        %458 = vmatprep.subr.mxu0 0.0
        %459 = vmatpush1.msra.mxu0 0.0
        %460 = vmatprep.subr.mxu0 0.0
        %461 = vmatpush1.msra.mxu0 0.0
        %462 = vmatprep.subr.mxu0 0.0
        %463 = vmatpush1.msra.mxu0 0.0
        %464 = vmatprep.subr.mxu0 0.0
        %465 = vmatpush1.msra.mxu0 0.0
        %466 = vmatprep.subr.mxu0 0.0
        %467 = vmatpush1.msra.mxu0 0.0
        %468 = vmatprep.subr.mxu0 0.0
        %469 = vmatpush1.msra.mxu0 0.0
        %470 = vmatprep.subr.mxu0 0.0
        %471 = vmatpush1.msra.mxu0 0.0
        %472 = vmatprep.subr.mxu0 0.0
        %473 = vmatpush1.msra.mxu0 0.0
        %474 = vmatprep.subr.mxu0 0.0
        %475 = vmatpush1.msra.mxu0 0.0
        %476 = vmatprep.subr.mxu0 0.0
        %477 = vmatpush1.msra.mxu0 0.0
        %478 = vmatprep.subr.mxu0 0.0
        %479 = vmatpush1.msra.mxu0 0.0
        %480 = vmatprep.subr.mxu0 0.0
        %481 = vmatpush1.msra.mxu0 0.0
        %482 = vmatprep.subr.mxu0 0.0
        %483 = vmatpush1.msra.mxu0 0.0
        %484 = vmatprep.subr.mxu0 0.0
        %485 = vmatpush1.msra.mxu0 0.0
        %486 = vmatprep.subr.mxu0 0.0
        %487 = vmatpush1.msra.mxu0 0.0
        %488 = vmatprep.subr.mxu0 0.0
        %489 = vmatpush1.msra.mxu0 %v456
        %490 = vmatprep.subr.mxu0 0.0
        %491 = vmatpush2.msra.mxu0 0.0
        %492 = vmatprep.subr.mxu0 0.0
        %493 = vmatpush2.msra.mxu0 0.0
        %494 = vmatprep.subr.mxu0 0.0
        %495 = vmatpush2.msra.mxu0 0.0
        %496 = vmatprep.subr.mxu0 0.0
        %497 = vmatpush2.msra.mxu0 0.0
        %498 = vmatprep.subr.mxu0 0.0
        %499 = vmatpush2.msra.mxu0 0.0
        %500 = vmatprep.subr.mxu0 0.0
        %501 = vmatpush2.msra.mxu0 0.0
        %502 = vmatprep.subr.mxu0 0.0
        %503 = vmatpush2.msra.mxu0 0.0
        %504 = vmatprep.subr.mxu0 0.0
        %505 = vmatpush2.msra.mxu0 0.0
        %506 = vmatprep.subr.mxu0 0.0
        %507 = vmatpush2.msra.mxu0 0.0
        %508 = vmatprep.subr.mxu0 0.0
        %509 = vmatpush2.msra.mxu0 0.0
        %510 = vmatprep.subr.mxu0 0.0
        %511 = vmatpush2.msra.mxu0 0.0
        %512 = vmatprep.subr.mxu0 0.0
        %513 = vmatpush2.msra.mxu0 0.0
        %514 = vmatprep.subr.mxu0 0.0
        %515 = vmatpush2.msra.mxu0 0.0
        %516 = vmatprep.subr.mxu0 0.0
        %517 = vmatpush2.msra.mxu0 0.0
        %518 = vmatprep.subr.mxu0 0.0
        %519 = vmatpush2.msra.mxu0 0.0
        %520 = vmatprep.subr.mxu0 0.0
        %521 = vmatpush2.msra.mxu0 0.0
        %522 = vmatprep.mubr.f32.mxu0 0.0
        %523 = vmatmul.mubr.f32.gmra.mxu0 %v407
        %v524 = vpop.f32.mrf.mxu0
        %v525 = vadd.f32 %v404, %v524
        %v526 = vpop.f32.mrf.mxu0
        %527 = vmatprep.mubr.f32.mxu0 0.0
        %528 = vmatmul.mubr.f32.gmra.mxu0 %v410
        %v529 = vpop.f32.mrf.mxu0
        %v530 = vadd.f32 %v404, %v529
        %v531 = vpop.f32.mrf.mxu0
        %532 = vmatprep.mubr.f32.mxu0 0.0
        %533 = vmatmul.mubr.f32.gmra.mxu0 %v413
        %v534 = vpop.f32.mrf.mxu0
        %v535 = vadd.f32 %v404, %v534
        %v536 = vpop.f32.mrf.mxu0
        %537 = vmatprep.mubr.f32.mxu0 0.0
        %538 = vmatmul.mubr.f32.gmra.mxu0 %v416
        %v539 = vpop.f32.mrf.mxu0
        %v540 = vadd.f32 %v404, %v539
        %v541 = vpop.f32.mrf.mxu0
        %542 = vmatprep.mubr.f32.mxu0 0.0
        %543 = vmatmul.mubr.f32.gmra.mxu0 %v419
        %v544 = vpop.f32.mrf.mxu0
        %v545 = vadd.f32 %v404, %v544
        %v546 = vpop.f32.mrf.mxu0
        %547 = vmatprep.mubr.f32.mxu0 0.0
        %548 = vmatmul.mubr.f32.gmra.mxu0 %v422
        %v549 = vpop.f32.mrf.mxu0
        %v550 = vadd.f32 %v404, %v549
        %v551 = vpop.f32.mrf.mxu0
        %552 = vmatprep.mubr.f32.mxu0 0.0
        %553 = vmatmul.mubr.f32.gmra.mxu0 %v425
        %v554 = vpop.f32.mrf.mxu0
        %v555 = vadd.f32 %v404, %v554
        %v556 = vpop.f32.mrf.mxu0
        %557 = vmatprep.mubr.f32.mxu0 0.0
        %558 = vmatmul.mubr.f32.gmra.mxu0 %v428
        %v559 = vpop.f32.mrf.mxu0
        %v560 = vadd.f32 %v404, %v559
        %v561 = vpop.f32.mrf.mxu0
        %562 = vmatprep.mubr.f32.mxu0 0.0
        %563 = vmatmul.mubr.f32.gmra.mxu0 %v431
        %v564 = vpop.f32.mrf.mxu0
        %v565 = vadd.f32 %v404, %v564
        %v566 = vpop.f32.mrf.mxu0
        %567 = vmatprep.mubr.f32.mxu0 0.0
        %568 = vmatmul.mubr.f32.gmra.mxu0 %v434
        %v569 = vpop.f32.mrf.mxu0
        %v570 = vadd.f32 %v404, %v569
        %v571 = vpop.f32.mrf.mxu0
        %572 = vmatprep.mubr.f32.mxu0 0.0
        %573 = vmatmul.mubr.f32.gmra.mxu0 %v437
        %v574 = vpop.f32.mrf.mxu0
        %v575 = vadd.f32 %v404, %v574
        %v576 = vpop.f32.mrf.mxu0
        %577 = vmatprep.mubr.f32.mxu0 0.0
        %578 = vmatmul.mubr.f32.gmra.mxu0 %v440
        %v579 = vpop.f32.mrf.mxu0
        %v580 = vadd.f32 %v404, %v579
        %v581 = vpop.f32.mrf.mxu0
        %582 = vmatprep.mubr.f32.mxu0 0.0
        %583 = vmatmul.mubr.f32.gmra.mxu0 %v443
        %v584 = vpop.f32.mrf.mxu0
        %v585 = vadd.f32 %v404, %v584
        %v586 = vpop.f32.mrf.mxu0
        %587 = vmatprep.mubr.f32.mxu0 0.0
        %588 = vmatmul.mubr.f32.gmra.mxu0 %v446
        %v589 = vpop.f32.mrf.mxu0
        %v590 = vadd.f32 %v404, %v589
        %v591 = vpop.f32.mrf.mxu0
        %592 = vmatprep.mubr.f32.mxu0 0.0
        %593 = vmatmul.mubr.f32.gmra.mxu0 %v449
        %v594 = vpop.f32.mrf.mxu0
        %v595 = vadd.f32 %v404, %v594
        %v596 = vpop.f32.mrf.mxu0
        %597 = vmatprep.mubr.f32.mxu0 0.0
        %598 = vmatmul.mubr.f32.gmra.mxu0 %v452
        %v599 = vpop.f32.mrf.mxu0
        %v600 = vadd.f32 %v404, %v599
        %v601 = vpop.f32.mrf.mxu0
        %602 = vdwg.mxu0
        %v603 = vld [vmem:[%s7 + $0x1] sm:$0x1]
        %v604 = vld [vmem:[%s7 + $0x3] sm:$0x1]
        %v605 = vpack.c.bf16 %v530, %v525
        %v606 = vpack.c.bf16 %v540, %v535
        %v607 = vpack.c.bf16 %v550, %v545
        %v608 = vpack.c.bf16 %v560, %v555
        %v609 = vpack.c.bf16 %v570, %v565
        %v610 = vpack.c.bf16 %v580, %v575
        %v611 = vpack.c.bf16 %v590, %v585
        %v612 = vpack.c.bf16 %v600, %v595
        %v613 = vld [vmem:[%s5] sm:$0xf]
        %v614 = vld [vmem:[%s5 + $0x4] sm:$0xf]
        %v615 = vld [vmem:[%s5 + $0x8] sm:$0xf]
        %v616 = vld [vmem:[%s5 + $0xc] sm:$0xf]
        %v633 = vunpack.c.l.b16 %v351
        %v634 = vunpack.c.l.b16 %v352
        %v635 = vunpack.c.l.b16 %v353
        %v636 = vunpack.c.l.b16 %v354
        %v637 = vunpack.c.l.b16 %v355
        %v638 = vunpack.c.l.b16 %v356
        %v639 = vunpack.c.l.b16 %v357
        %v640 = vunpack.c.l.b16 %v358
        %v641 = vunpack.c.l.b16 %v359
        %v642 = vunpack.c.l.b16 %v360
        %v643 = vunpack.c.l.b16 %v361
        %v644 = vunpack.c.l.b16 %v362
        %v645 = vunpack.c.l.b16 %v363
        %v646 = vunpack.c.l.b16 %v364
        %v647 = vunpack.c.l.b16 %v365
        %v648 = vunpack.c.l.b16 %v366
        %v649 = vpack.c.b16 %v634, %v633
        %v650 = vpack.c.b16 %v636, %v635
        %v651 = vpack.c.b16 %v638, %v637
        %v652 = vpack.c.b16 %v640, %v639
        %v653 = vpack.c.b16 %v642, %v641
        %v654 = vpack.c.b16 %v644, %v643
        %v655 = vpack.c.b16 %v646, %v645
        %v656 = vpack.c.b16 %v648, %v647
        %665 = vmatprep.subr.bf16.mxu0 0
        %666 = vmatpush1.bf16.msra.mxu0 %v612
        %667 = vmatprep.subr.bf16.mxu0 0
        %668 = vmatpush1.bf16.msra.mxu0 %v611
        %669 = vmatprep.subr.bf16.mxu0 0
        %670 = vmatpush1.bf16.msra.mxu0 %v610
        %671 = vmatprep.subr.bf16.mxu0 0
        %672 = vmatpush1.bf16.msra.mxu0 %v609
        %673 = vmatprep.subr.bf16.mxu0 0
        %674 = vmatpush1.bf16.msra.mxu0 %v608
        %675 = vmatprep.subr.bf16.mxu0 0
        %676 = vmatpush1.bf16.msra.mxu0 %v607
        %677 = vmatprep.subr.bf16.mxu0 0
        %678 = vmatpush1.bf16.msra.mxu0 %v606
        %679 = vmatprep.subr.bf16.mxu0 0
        %680 = vmatpush1.bf16.msra.mxu0 %v605
        %681 = vmatprep.subr.bf16.mxu0 0
        %682 = vmatpush2.bf16.msra.mxu0 0
        %683 = vmatprep.subr.bf16.mxu0 0
        %684 = vmatpush2.bf16.msra.mxu0 0
        %685 = vmatprep.subr.bf16.mxu0 0
        %686 = vmatpush2.bf16.msra.mxu0 0
        %687 = vmatprep.subr.bf16.mxu0 0
        %688 = vmatpush2.bf16.msra.mxu0 0
        %689 = vmatprep.subr.bf16.mxu0 0
        %690 = vmatpush2.bf16.msra.mxu0 0
        %691 = vmatprep.subr.bf16.mxu0 0
        %692 = vmatpush2.bf16.msra.mxu0 0
        %693 = vmatprep.subr.bf16.mxu0 0
        %694 = vmatpush2.bf16.msra.mxu0 0
        %695 = vmatprep.subr.bf16.mxu0 0
        %696 = vmatpush2.bf16.msra.mxu0 0
        %697 = vmatprep.mubr.bf16.mxu0 0
        %698 = vmatmul.mubr.bf16.gmra.mxu0 %v649
        %v699 = vpop.f32.mrf.mxu0
        %v700 = vadd.f32 0.0, %v699
        %v701 = vpop.f32.mrf.mxu0
        %v702 = vpop.f32.mrf.mxu0
        %v703 = vadd.f32 0.0, %v702
        %v704 = vpop.f32.mrf.mxu0
        %705 = vmatprep.mubr.bf16.mxu0 0
        %706 = vmatmul.mubr.bf16.gmra.mxu0 %v650
        %v707 = vpop.f32.mrf.mxu0
        %v708 = vadd.f32 0.0, %v707
        %v709 = vpop.f32.mrf.mxu0
        %v710 = vpop.f32.mrf.mxu0
        %v711 = vadd.f32 0.0, %v710
        %v712 = vpop.f32.mrf.mxu0
        %713 = vmatprep.mubr.bf16.mxu0 0
        %714 = vmatmul.mubr.bf16.gmra.mxu0 %v651
        %v715 = vpop.f32.mrf.mxu0
        %v716 = vadd.f32 0.0, %v715
        %v717 = vpop.f32.mrf.mxu0
        %v718 = vpop.f32.mrf.mxu0
        %v719 = vadd.f32 0.0, %v718
        %v720 = vpop.f32.mrf.mxu0
        %721 = vmatprep.mubr.bf16.mxu0 0
        %722 = vmatmul.mubr.bf16.gmra.mxu0 %v652
        %v723 = vpop.f32.mrf.mxu0
        %v724 = vadd.f32 0.0, %v723
        %v725 = vpop.f32.mrf.mxu0
        %v726 = vpop.f32.mrf.mxu0
        %v727 = vadd.f32 0.0, %v726
        %v728 = vpop.f32.mrf.mxu0
        %729 = vmatprep.mubr.bf16.mxu0 0
        %730 = vmatmul.mubr.bf16.gmra.mxu0 %v653
        %v731 = vpop.f32.mrf.mxu0
        %v732 = vadd.f32 0.0, %v731
        %v733 = vpop.f32.mrf.mxu0
        %v734 = vpop.f32.mrf.mxu0
        %v735 = vadd.f32 0.0, %v734
        %v736 = vpop.f32.mrf.mxu0
        %737 = vmatprep.mubr.bf16.mxu0 0
        %738 = vmatmul.mubr.bf16.gmra.mxu0 %v654
        %v739 = vpop.f32.mrf.mxu0
        %v740 = vadd.f32 0.0, %v739
        %v741 = vpop.f32.mrf.mxu0
        %v742 = vpop.f32.mrf.mxu0
        %v743 = vadd.f32 0.0, %v742
        %v744 = vpop.f32.mrf.mxu0
        %745 = vmatprep.mubr.bf16.mxu0 0
        %746 = vmatmul.mubr.bf16.gmra.mxu0 %v655
        %v747 = vpop.f32.mrf.mxu0
        %v748 = vadd.f32 0.0, %v747
        %v749 = vpop.f32.mrf.mxu0
        %v750 = vpop.f32.mrf.mxu0
        %v751 = vadd.f32 0.0, %v750
        %v752 = vpop.f32.mrf.mxu0
        %753 = vmatprep.mubr.bf16.mxu0 0
        %754 = vmatmul.mubr.bf16.gmra.mxu0 %v656
        %v755 = vpop.f32.mrf.mxu0
        %v756 = vadd.f32 0.0, %v755
        %v757 = vpop.f32.mrf.mxu0
        %v758 = vpop.f32.mrf.mxu0
        %v759 = vadd.f32 0.0, %v758
        %v760 = vpop.f32.mrf.mxu0
        %761 = vdwg.mxu0
        %v762 = vpack.c.bf16 %v703, %v700
        %v763 = vpack.c.bf16 %v711, %v708
        %v764 = vpack.c.bf16 %v719, %v716
        %v765 = vpack.c.bf16 %v727, %v724
        %v766 = vpack.c.bf16 %v735, %v732
        %v767 = vpack.c.bf16 %v743, %v740
        %v768 = vpack.c.bf16 %v751, %v748
        %v769 = vpack.c.bf16 %v759, %v756
        %s770 = scalar_lea.vmem %s5, 16
        %v771 = vld [vmem:[%s770] sm:$0xf]
        %v772 = vld [vmem:[%s770 + $0x4] sm:$0xf]
        %v773 = vld [vmem:[%s770 + $0x8] sm:$0xf]
        %v774 = vld [vmem:[%s770 + $0xc] sm:$0xf]
        %v779 = vunpack.c.l.b16 %v771
        %v780 = vunpack.c.l.b16 %v772
        %v781 = vunpack.c.l.b16 %v773
        %v782 = vunpack.c.l.b16 %v774
        %v783 = vpack.c.b16 %v780, %v779
        %v784 = vpack.c.b16 %v782, %v781
        %vm787 = vcmask 261120
        %v789 = vsel %vm787, %v762, 0
        %v792 = vsel %vm787, %v763, 0
        %v795 = vsel %vm787, %v764, 0
        %v798 = vsel %vm787, %v765, 0
        %v801 = vsel %vm787, %v766, 0
        %v804 = vsel %vm787, %v767, 0
        %v807 = vsel %vm787, %v768, 0
        %v810 = vsel %vm787, %v769, 0
        %812 = vmatprep.subr.bf16.mxu0 0
        %813 = vmatpush1.bf16.msra.mxu0 0
        %814 = vmatprep.subr.bf16.mxu0 0
        %815 = vmatpush1.bf16.msra.mxu0 0
        %816 = vmatprep.subr.bf16.mxu0 0
        %817 = vmatpush1.bf16.msra.mxu0 0
        %818 = vmatprep.subr.bf16.mxu0 0
        %819 = vmatpush1.bf16.msra.mxu0 0
        %820 = vmatprep.subr.bf16.mxu0 0
        %821 = vmatpush1.bf16.msra.mxu0 0
        %822 = vmatprep.subr.bf16.mxu0 0
        %823 = vmatpush1.bf16.msra.mxu0 0
        %824 = vmatprep.subr.bf16.mxu0 0
        %825 = vmatpush1.bf16.msra.mxu0 %v784
        %826 = vmatprep.subr.bf16.mxu0 0
        %827 = vmatpush1.bf16.msra.mxu0 %v783
        %828 = vmatprep.subr.bf16.mxu0 0
        %829 = vmatpush2.bf16.msra.mxu0 0
        %830 = vmatprep.subr.bf16.mxu0 0
        %831 = vmatpush2.bf16.msra.mxu0 0
        %832 = vmatprep.subr.bf16.mxu0 0
        %833 = vmatpush2.bf16.msra.mxu0 0
        %834 = vmatprep.subr.bf16.mxu0 0
        %835 = vmatpush2.bf16.msra.mxu0 0
        %836 = vmatprep.subr.bf16.mxu0 0
        %837 = vmatpush2.bf16.msra.mxu0 0
        %838 = vmatprep.subr.bf16.mxu0 0
        %839 = vmatpush2.bf16.msra.mxu0 0
        %840 = vmatprep.subr.bf16.mxu0 0
        %841 = vmatpush2.bf16.msra.mxu0 0
        %842 = vmatprep.subr.bf16.mxu0 0
        %843 = vmatpush2.bf16.msra.mxu0 0
        %844 = vmatprep.mubr.bf16.mxu0 0
        %845 = vmatmul.mubr.bf16.gmra.mxu0 %v789
        %v846 = vpop.f32.mrf.mxu0
        %v847 = vadd.f32 0.0, %v846
        %v848 = vpop.f32.mrf.mxu0
        %v849 = vpop.f32.mrf.mxu0
        %v850 = vadd.f32 0.0, %v849
        %v851 = vpop.f32.mrf.mxu0
        %852 = vmatprep.mubr.bf16.mxu0 0
        %853 = vmatmul.mubr.bf16.gmra.mxu0 %v792
        %v854 = vpop.f32.mrf.mxu0
        %v855 = vadd.f32 0.0, %v854
        %v856 = vpop.f32.mrf.mxu0
        %v857 = vpop.f32.mrf.mxu0
        %v858 = vadd.f32 0.0, %v857
        %v859 = vpop.f32.mrf.mxu0
        %860 = vmatprep.mubr.bf16.mxu0 0
        %861 = vmatmul.mubr.bf16.gmra.mxu0 %v795
        %v862 = vpop.f32.mrf.mxu0
        %v863 = vadd.f32 0.0, %v862
        %v864 = vpop.f32.mrf.mxu0
        %v865 = vpop.f32.mrf.mxu0
        %v866 = vadd.f32 0.0, %v865
        %v867 = vpop.f32.mrf.mxu0
        %868 = vmatprep.mubr.bf16.mxu0 0
        %869 = vmatmul.mubr.bf16.gmra.mxu0 %v798
        %v870 = vpop.f32.mrf.mxu0
        %v871 = vadd.f32 0.0, %v870
        %v872 = vpop.f32.mrf.mxu0
        %v873 = vpop.f32.mrf.mxu0
        %v874 = vadd.f32 0.0, %v873
        %v875 = vpop.f32.mrf.mxu0
        %876 = vmatprep.mubr.bf16.mxu0 0
        %877 = vmatmul.mubr.bf16.gmra.mxu0 %v801
        %v878 = vpop.f32.mrf.mxu0
        %v879 = vadd.f32 0.0, %v878
        %v880 = vpop.f32.mrf.mxu0
        %v881 = vpop.f32.mrf.mxu0
        %v882 = vadd.f32 0.0, %v881
        %v883 = vpop.f32.mrf.mxu0
        %884 = vmatprep.mubr.bf16.mxu0 0
        %885 = vmatmul.mubr.bf16.gmra.mxu0 %v804
        %v886 = vpop.f32.mrf.mxu0
        %v887 = vadd.f32 0.0, %v886
        %v888 = vpop.f32.mrf.mxu0
        %v889 = vpop.f32.mrf.mxu0
        %v890 = vadd.f32 0.0, %v889
        %v891 = vpop.f32.mrf.mxu0
        %892 = vmatprep.mubr.bf16.mxu0 0
        %893 = vmatmul.mubr.bf16.gmra.mxu0 %v807
        %v894 = vpop.f32.mrf.mxu0
        %v895 = vadd.f32 0.0, %v894
        %v896 = vpop.f32.mrf.mxu0
        %v897 = vpop.f32.mrf.mxu0
        %v898 = vadd.f32 0.0, %v897
        %v899 = vpop.f32.mrf.mxu0
        %900 = vmatprep.mubr.bf16.mxu0 0
        %901 = vmatmul.mubr.bf16.gmra.mxu0 %v810
        %v902 = vpop.f32.mrf.mxu0
        %v903 = vadd.f32 0.0, %v902
        %v904 = vpop.f32.mrf.mxu0
        %v905 = vpop.f32.mrf.mxu0
        %v906 = vadd.f32 0.0, %v905
        %v907 = vpop.f32.mrf.mxu0
        %908 = vdwg.mxu0
        %v913 = vunpack.c.l.b16 %v613
        %v914 = vunpack.c.l.b16 %v614
        %v915 = vunpack.c.l.b16 %v615
        %v916 = vunpack.c.l.b16 %v616
        %v917 = vpack.c.b16 %v914, %v913
        %v918 = vpack.c.b16 %v916, %v915
        %v922 = vsel %vm787, %v605, 0
        %v925 = vsel %vm787, %v606, 0
        %v928 = vsel %vm787, %v607, 0
        %v931 = vsel %vm787, %v608, 0
        %v934 = vsel %vm787, %v609, 0
        %v937 = vsel %vm787, %v610, 0
        %v940 = vsel %vm787, %v611, 0
        %v943 = vsel %vm787, %v612, 0
        %945 = vmatprep.subr.bf16.mxu0 0
        %946 = vmatpush1.bf16.msra.mxu0 0
        %947 = vmatprep.subr.bf16.mxu0 0
        %948 = vmatpush1.bf16.msra.mxu0 0
        %949 = vmatprep.subr.bf16.mxu0 0
        %950 = vmatpush1.bf16.msra.mxu0 0
        %951 = vmatprep.subr.bf16.mxu0 0
        %952 = vmatpush1.bf16.msra.mxu0 0
        %953 = vmatprep.subr.bf16.mxu0 0
        %954 = vmatpush1.bf16.msra.mxu0 0
        %955 = vmatprep.subr.bf16.mxu0 0
        %956 = vmatpush1.bf16.msra.mxu0 0
        %957 = vmatprep.subr.bf16.mxu0 0
        %958 = vmatpush1.bf16.msra.mxu0 %v918
        %959 = vmatprep.subr.bf16.mxu0 0
        %960 = vmatpush1.bf16.msra.mxu0 %v917
        %961 = vmatprep.subr.bf16.mxu0 0
        %962 = vmatpush2.bf16.msra.mxu0 0
        %963 = vmatprep.subr.bf16.mxu0 0
        %964 = vmatpush2.bf16.msra.mxu0 0
        %965 = vmatprep.subr.bf16.mxu0 0
        %966 = vmatpush2.bf16.msra.mxu0 0
        %967 = vmatprep.subr.bf16.mxu0 0
        %968 = vmatpush2.bf16.msra.mxu0 0
        %969 = vmatprep.subr.bf16.mxu0 0
        %970 = vmatpush2.bf16.msra.mxu0 0
        %971 = vmatprep.subr.bf16.mxu0 0
        %972 = vmatpush2.bf16.msra.mxu0 0
        %973 = vmatprep.subr.bf16.mxu0 0
        %974 = vmatpush2.bf16.msra.mxu0 0
        %975 = vmatprep.subr.bf16.mxu0 0
        %976 = vmatpush2.bf16.msra.mxu0 0
        %977 = vmatprep.mubr.bf16.mxu0 0
        %978 = vmatmul.mubr.bf16.gmra.mxu0 %v922
        %v979 = vpop.f32.mrf.mxu0
        %v980 = vadd.f32 %v847, %v979
        %v981 = vpop.f32.mrf.mxu0
        %v982 = vpop.f32.mrf.mxu0
        %v983 = vadd.f32 %v850, %v982
        %v984 = vpop.f32.mrf.mxu0
        %985 = vmatprep.mubr.bf16.mxu0 0
        %986 = vmatmul.mubr.bf16.gmra.mxu0 %v925
        %v987 = vpop.f32.mrf.mxu0
        %v988 = vadd.f32 %v855, %v987
        %v989 = vpop.f32.mrf.mxu0
        %v990 = vpop.f32.mrf.mxu0
        %v991 = vadd.f32 %v858, %v990
        %v992 = vpop.f32.mrf.mxu0
        %993 = vmatprep.mubr.bf16.mxu0 0
        %994 = vmatmul.mubr.bf16.gmra.mxu0 %v928
        %v995 = vpop.f32.mrf.mxu0
        %v996 = vadd.f32 %v863, %v995
        %v997 = vpop.f32.mrf.mxu0
        %v998 = vpop.f32.mrf.mxu0
        %v999 = vadd.f32 %v866, %v998
        %v1000 = vpop.f32.mrf.mxu0
        %1001 = vmatprep.mubr.bf16.mxu0 0
        %1002 = vmatmul.mubr.bf16.gmra.mxu0 %v931
        %v1003 = vpop.f32.mrf.mxu0
        %v1004 = vadd.f32 %v871, %v1003
        %v1005 = vpop.f32.mrf.mxu0
        %v1006 = vpop.f32.mrf.mxu0
        %v1007 = vadd.f32 %v874, %v1006
        %v1008 = vpop.f32.mrf.mxu0
        %1009 = vmatprep.mubr.bf16.mxu0 0
        %1010 = vmatmul.mubr.bf16.gmra.mxu0 %v934
        %v1011 = vpop.f32.mrf.mxu0
        %v1012 = vadd.f32 %v879, %v1011
        %v1013 = vpop.f32.mrf.mxu0
        %v1014 = vpop.f32.mrf.mxu0
        %v1015 = vadd.f32 %v882, %v1014
        %v1016 = vpop.f32.mrf.mxu0
        %1017 = vmatprep.mubr.bf16.mxu0 0
        %1018 = vmatmul.mubr.bf16.gmra.mxu0 %v937
        %v1019 = vpop.f32.mrf.mxu0
        %v1020 = vadd.f32 %v887, %v1019
        %v1021 = vpop.f32.mrf.mxu0
        %v1022 = vpop.f32.mrf.mxu0
        %v1023 = vadd.f32 %v890, %v1022
        %v1024 = vpop.f32.mrf.mxu0
        %1025 = vmatprep.mubr.bf16.mxu0 0
        %1026 = vmatmul.mubr.bf16.gmra.mxu0 %v940
        %v1027 = vpop.f32.mrf.mxu0
        %v1028 = vadd.f32 %v895, %v1027
        %v1029 = vpop.f32.mrf.mxu0
        %v1030 = vpop.f32.mrf.mxu0
        %v1031 = vadd.f32 %v898, %v1030
        %v1032 = vpop.f32.mrf.mxu0
        %1033 = vmatprep.mubr.bf16.mxu0 0
        %1034 = vmatmul.mubr.bf16.gmra.mxu0 %v943
        %v1035 = vpop.f32.mrf.mxu0
        %v1036 = vadd.f32 %v903, %v1035
        %v1037 = vpop.f32.mrf.mxu0
        %v1038 = vpop.f32.mrf.mxu0
        %v1039 = vadd.f32 %v906, %v1038
        %v1040 = vpop.f32.mrf.mxu0
        %1041 = vdwg.mxu0
        %1042 = vmatprep.subr.bf16.mxu0 0
        %1043 = vmatpush1.bf16.msra.mxu0 %v769
        %1044 = vmatprep.subr.bf16.mxu0 0
        %1045 = vmatpush1.bf16.msra.mxu0 %v768
        %1046 = vmatprep.subr.bf16.mxu0 0
        %1047 = vmatpush1.bf16.msra.mxu0 %v767
        %1048 = vmatprep.subr.bf16.mxu0 0
        %1049 = vmatpush1.bf16.msra.mxu0 %v766
        %1050 = vmatprep.subr.bf16.mxu0 0
        %1051 = vmatpush1.bf16.msra.mxu0 %v765
        %1052 = vmatprep.subr.bf16.mxu0 0
        %1053 = vmatpush1.bf16.msra.mxu0 %v764
        %1054 = vmatprep.subr.bf16.mxu0 0
        %1055 = vmatpush1.bf16.msra.mxu0 %v763
        %1056 = vmatprep.subr.bf16.mxu0 0
        %1057 = vmatpush1.bf16.msra.mxu0 %v762
        %1058 = vmatprep.subr.bf16.mxu0 0
        %1059 = vmatpush2.bf16.msra.mxu0 0
        %1060 = vmatprep.subr.bf16.mxu0 0
        %1061 = vmatpush2.bf16.msra.mxu0 0
        %1062 = vmatprep.subr.bf16.mxu0 0
        %1063 = vmatpush2.bf16.msra.mxu0 0
        %1064 = vmatprep.subr.bf16.mxu0 0
        %1065 = vmatpush2.bf16.msra.mxu0 0
        %1066 = vmatprep.subr.bf16.mxu0 0
        %1067 = vmatpush2.bf16.msra.mxu0 0
        %1068 = vmatprep.subr.bf16.mxu0 0
        %1069 = vmatpush2.bf16.msra.mxu0 0
        %1070 = vmatprep.subr.bf16.mxu0 0
        %1071 = vmatpush2.bf16.msra.mxu0 0
        %1072 = vmatprep.subr.bf16.mxu0 0
        %1073 = vmatpush2.bf16.msra.mxu0 0
        %1074 = vmatprep.mubr.bf16.mxu0 0
        %1075 = vmatmul.mubr.bf16.gmra.mxu0 %v649
        %v1076 = vpop.f32.mrf.mxu0
        %v1077 = vadd.f32 0.0, %v1076
        %v1078 = vpop.f32.mrf.mxu0
        %v1079 = vpop.f32.mrf.mxu0
        %v1080 = vadd.f32 0.0, %v1079
        %v1081 = vpop.f32.mrf.mxu0
        %1082 = vmatprep.mubr.bf16.mxu0 0
        %1083 = vmatmul.mubr.bf16.gmra.mxu0 %v650
        %v1084 = vpop.f32.mrf.mxu0
        %v1085 = vadd.f32 0.0, %v1084
        %v1086 = vpop.f32.mrf.mxu0
        %v1087 = vpop.f32.mrf.mxu0
        %v1088 = vadd.f32 0.0, %v1087
        %v1089 = vpop.f32.mrf.mxu0
        %1090 = vmatprep.mubr.bf16.mxu0 0
        %1091 = vmatmul.mubr.bf16.gmra.mxu0 %v651
        %v1092 = vpop.f32.mrf.mxu0
        %v1093 = vadd.f32 0.0, %v1092
        %v1094 = vpop.f32.mrf.mxu0
        %v1095 = vpop.f32.mrf.mxu0
        %v1096 = vadd.f32 0.0, %v1095
        %v1097 = vpop.f32.mrf.mxu0
        %1098 = vmatprep.mubr.bf16.mxu0 0
        %1099 = vmatmul.mubr.bf16.gmra.mxu0 %v652
        %v1100 = vpop.f32.mrf.mxu0
        %v1101 = vadd.f32 0.0, %v1100
        %v1102 = vpop.f32.mrf.mxu0
        %v1103 = vpop.f32.mrf.mxu0
        %v1104 = vadd.f32 0.0, %v1103
        %v1105 = vpop.f32.mrf.mxu0
        %1106 = vmatprep.mubr.bf16.mxu0 0
        %1107 = vmatmul.mubr.bf16.gmra.mxu0 %v653
        %v1108 = vpop.f32.mrf.mxu0
        %v1109 = vadd.f32 0.0, %v1108
        %v1110 = vpop.f32.mrf.mxu0
        %v1111 = vpop.f32.mrf.mxu0
        %v1112 = vadd.f32 0.0, %v1111
        %v1113 = vpop.f32.mrf.mxu0
        %1114 = vmatprep.mubr.bf16.mxu0 0
        %1115 = vmatmul.mubr.bf16.gmra.mxu0 %v654
        %v1116 = vpop.f32.mrf.mxu0
        %v1117 = vadd.f32 0.0, %v1116
        %v1118 = vpop.f32.mrf.mxu0
        %v1119 = vpop.f32.mrf.mxu0
        %v1120 = vadd.f32 0.0, %v1119
        %v1121 = vpop.f32.mrf.mxu0
        %1122 = vmatprep.mubr.bf16.mxu0 0
        %1123 = vmatmul.mubr.bf16.gmra.mxu0 %v655
        %v1124 = vpop.f32.mrf.mxu0
        %v1125 = vadd.f32 0.0, %v1124
        %v1126 = vpop.f32.mrf.mxu0
        %v1127 = vpop.f32.mrf.mxu0
        %v1128 = vadd.f32 0.0, %v1127
        %v1129 = vpop.f32.mrf.mxu0
        %1130 = vmatprep.mubr.bf16.mxu0 0
        %1131 = vmatmul.mubr.bf16.gmra.mxu0 %v656
        %v1132 = vpop.f32.mrf.mxu0
        %v1133 = vadd.f32 0.0, %v1132
        %v1134 = vpop.f32.mrf.mxu0
        %v1135 = vpop.f32.mrf.mxu0
        %v1136 = vadd.f32 0.0, %v1135
        %v1137 = vpop.f32.mrf.mxu0
        %1138 = vdwg.mxu0
        %v1139 = vmul.f32 %v1077, 2.0
        %v1140 = vmul.f32 %v1080, 2.0
        %v1141 = vmul.f32 %v1085, 2.0
        %v1142 = vmul.f32 %v1088, 2.0
        %v1143 = vmul.f32 %v1093, 2.0
        %v1144 = vmul.f32 %v1096, 2.0
        %v1145 = vmul.f32 %v1101, 2.0
        %v1146 = vmul.f32 %v1104, 2.0
        %v1147 = vmul.f32 %v1109, 2.0
        %v1148 = vmul.f32 %v1112, 2.0
        %v1149 = vmul.f32 %v1117, 2.0
        %v1150 = vmul.f32 %v1120, 2.0
        %v1151 = vmul.f32 %v1125, 2.0
        %v1152 = vmul.f32 %v1128, 2.0
        %v1153 = vmul.f32 %v1133, 2.0
        %v1154 = vmul.f32 %v1136, 2.0
        %v1155 = vsub.f32 %v1139, %v525
        %v1156 = vsub.f32 %v1140, %v530
        %v1157 = vsub.f32 %v1141, %v535
        %v1158 = vsub.f32 %v1142, %v540
        %v1159 = vsub.f32 %v1143, %v545
        %v1160 = vsub.f32 %v1144, %v550
        %v1161 = vsub.f32 %v1145, %v555
        %v1162 = vsub.f32 %v1146, %v560
        %v1163 = vsub.f32 %v1147, %v565
        %v1164 = vsub.f32 %v1148, %v570
        %v1165 = vsub.f32 %v1149, %v575
        %v1166 = vsub.f32 %v1150, %v580
        %v1167 = vsub.f32 %v1151, %v585
        %v1168 = vsub.f32 %v1152, %v590
        %v1169 = vsub.f32 %v1153, %v595
        %v1170 = vsub.f32 %v1154, %v600
        %v1171 = vpack.c.bf16 %v1156, %v1155
        %v1172 = vpack.c.bf16 %v1158, %v1157
        %v1173 = vpack.c.bf16 %v1160, %v1159
        %v1174 = vpack.c.bf16 %v1162, %v1161
        %v1175 = vpack.c.bf16 %v1164, %v1163
        %v1176 = vpack.c.bf16 %v1166, %v1165
        %v1177 = vpack.c.bf16 %v1168, %v1167
        %v1178 = vpack.c.bf16 %v1170, %v1169
        %s1179 = scalar_lea.vmem %s5, 32
        %v1180 = vld [vmem:[%s1179] sm:$0xf]
        %v1181 = vld [vmem:[%s1179 + $0x4] sm:$0xf]
        %v1182 = vld [vmem:[%s1179 + $0x8] sm:$0xf]
        %v1183 = vld [vmem:[%s1179 + $0xc] sm:$0xf]
        %v1188 = vunpack.c.l.b16 %v1180
        %v1189 = vunpack.c.l.b16 %v1181
        %v1190 = vunpack.c.l.b16 %v1182
        %v1191 = vunpack.c.l.b16 %v1183
        %v1192 = vpack.c.b16 %v1189, %v1188
        %v1193 = vpack.c.b16 %v1191, %v1190
        %v1197 = vsel %vm787, %v1171, 0
        %v1200 = vsel %vm787, %v1172, 0
        %v1203 = vsel %vm787, %v1173, 0
        %v1206 = vsel %vm787, %v1174, 0
        %v1209 = vsel %vm787, %v1175, 0
        %v1212 = vsel %vm787, %v1176, 0
        %v1215 = vsel %vm787, %v1177, 0
        %v1218 = vsel %vm787, %v1178, 0
        %1220 = vmatprep.subr.bf16.mxu0 0
        %1221 = vmatpush1.bf16.msra.mxu0 0
        %1222 = vmatprep.subr.bf16.mxu0 0
        %1223 = vmatpush1.bf16.msra.mxu0 0
        %1224 = vmatprep.subr.bf16.mxu0 0
        %1225 = vmatpush1.bf16.msra.mxu0 0
        %1226 = vmatprep.subr.bf16.mxu0 0
        %1227 = vmatpush1.bf16.msra.mxu0 0
        %1228 = vmatprep.subr.bf16.mxu0 0
        %1229 = vmatpush1.bf16.msra.mxu0 0
        %1230 = vmatprep.subr.bf16.mxu0 0
        %1231 = vmatpush1.bf16.msra.mxu0 0
        %1232 = vmatprep.subr.bf16.mxu0 0
        %1233 = vmatpush1.bf16.msra.mxu0 %v1193
        %1234 = vmatprep.subr.bf16.mxu0 0
        %1235 = vmatpush1.bf16.msra.mxu0 %v1192
        %1236 = vmatprep.subr.bf16.mxu0 0
        %1237 = vmatpush2.bf16.msra.mxu0 0
        %1238 = vmatprep.subr.bf16.mxu0 0
        %1239 = vmatpush2.bf16.msra.mxu0 0
        %1240 = vmatprep.subr.bf16.mxu0 0
        %1241 = vmatpush2.bf16.msra.mxu0 0
        %1242 = vmatprep.subr.bf16.mxu0 0
        %1243 = vmatpush2.bf16.msra.mxu0 0
        %1244 = vmatprep.subr.bf16.mxu0 0
        %1245 = vmatpush2.bf16.msra.mxu0 0
        %1246 = vmatprep.subr.bf16.mxu0 0
        %1247 = vmatpush2.bf16.msra.mxu0 0
        %1248 = vmatprep.subr.bf16.mxu0 0
        %1249 = vmatpush2.bf16.msra.mxu0 0
        %1250 = vmatprep.subr.bf16.mxu0 0
        %1251 = vmatpush2.bf16.msra.mxu0 0
        %1252 = vmatprep.mubr.bf16.mxu0 0
        %1253 = vmatmul.mubr.bf16.gmra.mxu0 %v1197
        %v1254 = vpop.f32.mrf.mxu0
        %v1255 = vadd.f32 0.0, %v1254
        %v1256 = vpop.f32.mrf.mxu0
        %v1257 = vpop.f32.mrf.mxu0
        %v1258 = vadd.f32 0.0, %v1257
        %v1259 = vpop.f32.mrf.mxu0
        %1260 = vmatprep.mubr.bf16.mxu0 0
        %1261 = vmatmul.mubr.bf16.gmra.mxu0 %v1200
        %v1262 = vpop.f32.mrf.mxu0
        %v1263 = vadd.f32 0.0, %v1262
        %v1264 = vpop.f32.mrf.mxu0
        %v1265 = vpop.f32.mrf.mxu0
        %v1266 = vadd.f32 0.0, %v1265
        %v1267 = vpop.f32.mrf.mxu0
        %1268 = vmatprep.mubr.bf16.mxu0 0
        %1269 = vmatmul.mubr.bf16.gmra.mxu0 %v1203
        %v1270 = vpop.f32.mrf.mxu0
        %v1271 = vadd.f32 0.0, %v1270
        %v1272 = vpop.f32.mrf.mxu0
        %v1273 = vpop.f32.mrf.mxu0
        %v1274 = vadd.f32 0.0, %v1273
        %v1275 = vpop.f32.mrf.mxu0
        %1276 = vmatprep.mubr.bf16.mxu0 0
        %1277 = vmatmul.mubr.bf16.gmra.mxu0 %v1206
        %v1278 = vpop.f32.mrf.mxu0
        %v1279 = vadd.f32 0.0, %v1278
        %v1280 = vpop.f32.mrf.mxu0
        %v1281 = vpop.f32.mrf.mxu0
        %v1282 = vadd.f32 0.0, %v1281
        %v1283 = vpop.f32.mrf.mxu0
        %1284 = vmatprep.mubr.bf16.mxu0 0
        %1285 = vmatmul.mubr.bf16.gmra.mxu0 %v1209
        %v1286 = vpop.f32.mrf.mxu0
        %v1287 = vadd.f32 0.0, %v1286
        %v1288 = vpop.f32.mrf.mxu0
        %v1289 = vpop.f32.mrf.mxu0
        %v1290 = vadd.f32 0.0, %v1289
        %v1291 = vpop.f32.mrf.mxu0
        %1292 = vmatprep.mubr.bf16.mxu0 0
        %1293 = vmatmul.mubr.bf16.gmra.mxu0 %v1212
        %v1294 = vpop.f32.mrf.mxu0
        %v1295 = vadd.f32 0.0, %v1294
        %v1296 = vpop.f32.mrf.mxu0
        %v1297 = vpop.f32.mrf.mxu0
        %v1298 = vadd.f32 0.0, %v1297
        %v1299 = vpop.f32.mrf.mxu0
        %1300 = vmatprep.mubr.bf16.mxu0 0
        %1301 = vmatmul.mubr.bf16.gmra.mxu0 %v1215
        %v1302 = vpop.f32.mrf.mxu0
        %v1303 = vadd.f32 0.0, %v1302
        %v1304 = vpop.f32.mrf.mxu0
        %v1305 = vpop.f32.mrf.mxu0
        %v1306 = vadd.f32 0.0, %v1305
        %v1307 = vpop.f32.mrf.mxu0
        %1308 = vmatprep.mubr.bf16.mxu0 0
        %1309 = vmatmul.mubr.bf16.gmra.mxu0 %v1218
        %v1310 = vpop.f32.mrf.mxu0
        %v1311 = vadd.f32 0.0, %v1310
        %v1312 = vpop.f32.mrf.mxu0
        %v1313 = vpop.f32.mrf.mxu0
        %v1314 = vadd.f32 0.0, %v1313
        %v1315 = vpop.f32.mrf.mxu0
        %1316 = vdwg.mxu0
        %v1317 = vadd.f32 %v980, %v1255
        %v1318 = vadd.f32 %v983, %v1258
        %v1319 = vadd.f32 %v988, %v1263
        %v1320 = vadd.f32 %v991, %v1266
        %v1321 = vadd.f32 %v996, %v1271
        %v1322 = vadd.f32 %v999, %v1274
        %v1323 = vadd.f32 %v1004, %v1279
        %v1324 = vadd.f32 %v1007, %v1282
        %v1325 = vadd.f32 %v1012, %v1287
        %v1326 = vadd.f32 %v1015, %v1290
        %v1327 = vadd.f32 %v1020, %v1295
        %v1328 = vadd.f32 %v1023, %v1298
        %v1329 = vadd.f32 %v1028, %v1303
        %v1330 = vadd.f32 %v1031, %v1306
        %v1331 = vadd.f32 %v1036, %v1311
        %v1332 = vadd.f32 %v1039, %v1314
        %v1333 = vlaneseq
        %v1334 = vshrl.u32 %v1333, 7
        %v1335 = vsub.s32 0, %v1334
        %v1336 = vrot.slane %v603, %v1335
        %v1337 = vadd.f32 %v1317, %v1336
        %v1338 = vadd.f32 %v1318, %v1336
        %v1339 = vadd.f32 %v1319, %v1336
        %v1340 = vadd.f32 %v1320, %v1336
        %v1341 = vadd.f32 %v1321, %v1336
        %v1342 = vadd.f32 %v1322, %v1336
        %v1343 = vadd.f32 %v1323, %v1336
        %v1344 = vadd.f32 %v1324, %v1336
        %v1345 = vadd.f32 %v1325, %v1336
        %v1346 = vadd.f32 %v1326, %v1336
        %v1347 = vadd.f32 %v1327, %v1336
        %v1348 = vadd.f32 %v1328, %v1336
        %v1349 = vadd.f32 %v1329, %v1336
        %v1350 = vadd.f32 %v1330, %v1336
        %v1351 = vadd.f32 %v1331, %v1336
        %v1352 = vadd.f32 %v1332, %v1336
        %1354 = vset.pattern.permute.xlu0 0
        %1355 = vperm.xlu0 %1354, %v383
        %v1356 = vpop.permute.xlu0 %1355
        %1359 = vset.pattern.permute.xlu0 0
        %1360 = vperm.xlu0 %1359, %v384
        %v1361 = vpop.permute.xlu0 %1360
        %1364 = vset.pattern.permute.xlu0 0
        %1365 = vperm.xlu0 %1364, %v385
        %v1366 = vpop.permute.xlu0 %1365
        %1369 = vset.pattern.permute.xlu0 0
        %1370 = vperm.xlu0 %1369, %v386
        %v1371 = vpop.permute.xlu0 %1370
        %1374 = vset.pattern.permute.xlu0 0
        %1375 = vperm.xlu0 %1374, %v387
        %v1376 = vpop.permute.xlu0 %1375
        %1379 = vset.pattern.permute.xlu0 0
        %1380 = vperm.xlu0 %1379, %v388
        %v1381 = vpop.permute.xlu0 %1380
        %1384 = vset.pattern.permute.xlu0 0
        %1385 = vperm.xlu0 %1384, %v389
        %v1386 = vpop.permute.xlu0 %1385
        %1389 = vset.pattern.permute.xlu0 0
        %1390 = vperm.xlu0 %1389, %v390
        %v1391 = vpop.permute.xlu0 %1390
        %1394 = vset.pattern.permute.xlu0 0
        %1395 = vperm.xlu0 %1394, %v391
        %v1396 = vpop.permute.xlu0 %1395
        %1399 = vset.pattern.permute.xlu0 0
        %1400 = vperm.xlu0 %1399, %v392
        %v1401 = vpop.permute.xlu0 %1400
        %1404 = vset.pattern.permute.xlu0 0
        %1405 = vperm.xlu0 %1404, %v393
        %v1406 = vpop.permute.xlu0 %1405
        %1409 = vset.pattern.permute.xlu0 0
        %1410 = vperm.xlu0 %1409, %v394
        %v1411 = vpop.permute.xlu0 %1410
        %1414 = vset.pattern.permute.xlu0 0
        %1415 = vperm.xlu0 %1414, %v395
        %v1416 = vpop.permute.xlu0 %1415
        %1419 = vset.pattern.permute.xlu0 0
        %1420 = vperm.xlu0 %1419, %v396
        %v1421 = vpop.permute.xlu0 %1420
        %1424 = vset.pattern.permute.xlu0 0
        %1425 = vperm.xlu0 %1424, %v397
        %v1426 = vpop.permute.xlu0 %1425
        %1429 = vset.pattern.permute.xlu0 0
        %1430 = vperm.xlu0 %1429, %v398
        %v1431 = vpop.permute.xlu0 %1430
        %v1433 = vmul.f32 %v1337, %v1356
        %v1434 = vmul.f32 %v1338, %v1361
        %v1435 = vmul.f32 %v1339, %v1366
        %v1436 = vmul.f32 %v1340, %v1371
        %v1437 = vmul.f32 %v1341, %v1376
        %v1438 = vmul.f32 %v1342, %v1381
        %v1439 = vmul.f32 %v1343, %v1386
        %v1440 = vmul.f32 %v1344, %v1391
        %v1441 = vmul.f32 %v1345, %v1396
        %v1442 = vmul.f32 %v1346, %v1401
        %v1443 = vmul.f32 %v1347, %v1406
        %v1444 = vmul.f32 %v1348, %v1411
        %v1445 = vmul.f32 %v1349, %v1416
        %v1446 = vmul.f32 %v1350, %v1421
        %v1447 = vmul.f32 %v1351, %v1426
        %v1448 = vmul.f32 %v1352, %v1431
        %v1449 = vlaneseq
        %v1450 = vshrl.u32 %v1449, 7
        %v1451 = vsub.s32 0, %v1450
        %v1452 = vrot.slane %v604, %v1451
        %v1453 = vadd.f32 %v1433, %v1452
        %v1454 = vadd.f32 %v1434, %v1452
        %v1455 = vadd.f32 %v1435, %v1452
        %v1456 = vadd.f32 %v1436, %v1452
        %v1457 = vadd.f32 %v1437, %v1452
        %v1458 = vadd.f32 %v1438, %v1452
        %v1459 = vadd.f32 %v1439, %v1452
        %v1460 = vadd.f32 %v1440, %v1452
        %v1461 = vadd.f32 %v1441, %v1452
        %v1462 = vadd.f32 %v1442, %v1452
        %v1463 = vadd.f32 %v1443, %v1452
        %v1464 = vadd.f32 %v1444, %v1452
        %v1465 = vadd.f32 %v1445, %v1452
        %v1466 = vadd.f32 %v1446, %v1452
        %v1467 = vadd.f32 %v1447, %v1452
        %v1468 = vadd.f32 %v1448, %v1452
        %v1469 = vmax.f32 %v1453, 0.0
        %v1470 = vmax.f32 %v1454, 0.0
        %v1471 = vmax.f32 %v1455, 0.0
        %v1472 = vmax.f32 %v1456, 0.0
        %v1473 = vmax.f32 %v1457, 0.0
        %v1474 = vmax.f32 %v1458, 0.0
        %v1475 = vmax.f32 %v1459, 0.0
        %v1476 = vmax.f32 %v1460, 0.0
        %v1477 = vmax.f32 %v1461, 0.0
        %v1478 = vmax.f32 %v1462, 0.0
        %v1479 = vmax.f32 %v1463, 0.0
        %v1480 = vmax.f32 %v1464, 0.0
        %v1481 = vmax.f32 %v1465, 0.0
        %v1482 = vmax.f32 %v1466, 0.0
        %v1483 = vmax.f32 %v1467, 0.0
        %v1484 = vmax.f32 %v1468, 0.0
        %v1485 = vadd.f32 %v525, %v1469
        %v1486 = vadd.f32 %v530, %v1470
        %v1487 = vadd.f32 %v535, %v1471
        %v1488 = vadd.f32 %v540, %v1472
        %v1489 = vadd.f32 %v545, %v1473
        %v1490 = vadd.f32 %v550, %v1474
        %v1491 = vadd.f32 %v555, %v1475
        %v1492 = vadd.f32 %v560, %v1476
        %v1493 = vadd.f32 %v565, %v1477
        %v1494 = vadd.f32 %v570, %v1478
        %v1495 = vadd.f32 %v575, %v1479
        %v1496 = vadd.f32 %v580, %v1480
        %v1497 = vadd.f32 %v585, %v1481
        %v1498 = vadd.f32 %v590, %v1482
        %v1499 = vadd.f32 %v595, %v1483
        %v1500 = vadd.f32 %v600, %v1484
        %v1501 = vld [vmem:[%s7 + $0x2] sm:$0x1]
        %v1502 = vld [vmem:[%s7 + $0x4] sm:$0x1]
        %v1503 = vpack.c.bf16 %v1486, %v1485
        %v1504 = vpack.c.bf16 %v1488, %v1487
        %v1505 = vpack.c.bf16 %v1490, %v1489
        %v1506 = vpack.c.bf16 %v1492, %v1491
        %v1507 = vpack.c.bf16 %v1494, %v1493
        %v1508 = vpack.c.bf16 %v1496, %v1495
        %v1509 = vpack.c.bf16 %v1498, %v1497
        %v1510 = vpack.c.bf16 %v1500, %v1499
        %s1511 = scalar_lea.vmem %s5, 48
        %v1512 = vld [vmem:[%s1511] sm:$0xf]
        %v1513 = vld [vmem:[%s1511 + $0x4] sm:$0xf]
        %v1514 = vld [vmem:[%s1511 + $0x8] sm:$0xf]
        %v1515 = vld [vmem:[%s1511 + $0xc] sm:$0xf]
        %1516 = vmatprep.subr.bf16.mxu0 0
        %1517 = vmatpush1.bf16.msra.mxu0 %v1510
        %1518 = vmatprep.subr.bf16.mxu0 0
        %1519 = vmatpush1.bf16.msra.mxu0 %v1509
        %1520 = vmatprep.subr.bf16.mxu0 0
        %1521 = vmatpush1.bf16.msra.mxu0 %v1508
        %1522 = vmatprep.subr.bf16.mxu0 0
        %1523 = vmatpush1.bf16.msra.mxu0 %v1507
        %1524 = vmatprep.subr.bf16.mxu0 0
        %1525 = vmatpush1.bf16.msra.mxu0 %v1506
        %1526 = vmatprep.subr.bf16.mxu0 0
        %1527 = vmatpush1.bf16.msra.mxu0 %v1505
        %1528 = vmatprep.subr.bf16.mxu0 0
        %1529 = vmatpush1.bf16.msra.mxu0 %v1504
        %1530 = vmatprep.subr.bf16.mxu0 0
        %1531 = vmatpush1.bf16.msra.mxu0 %v1503
        %1532 = vmatprep.subr.bf16.mxu0 0
        %1533 = vmatpush2.bf16.msra.mxu0 0
        %1534 = vmatprep.subr.bf16.mxu0 0
        %1535 = vmatpush2.bf16.msra.mxu0 0
        %1536 = vmatprep.subr.bf16.mxu0 0
        %1537 = vmatpush2.bf16.msra.mxu0 0
        %1538 = vmatprep.subr.bf16.mxu0 0
        %1539 = vmatpush2.bf16.msra.mxu0 0
        %1540 = vmatprep.subr.bf16.mxu0 0
        %1541 = vmatpush2.bf16.msra.mxu0 0
        %1542 = vmatprep.subr.bf16.mxu0 0
        %1543 = vmatpush2.bf16.msra.mxu0 0
        %1544 = vmatprep.subr.bf16.mxu0 0
        %1545 = vmatpush2.bf16.msra.mxu0 0
        %1546 = vmatprep.subr.bf16.mxu0 0
        %1547 = vmatpush2.bf16.msra.mxu0 0
        %1548 = vmatprep.mubr.bf16.mxu0 0
        %1549 = vmatmul.mubr.bf16.gmra.mxu0 %v649
        %v1550 = vpop.f32.mrf.mxu0
        %v1551 = vadd.f32 0.0, %v1550
        %v1552 = vpop.f32.mrf.mxu0
        %v1553 = vpop.f32.mrf.mxu0
        %v1554 = vadd.f32 0.0, %v1553
        %v1555 = vpop.f32.mrf.mxu0
        %1556 = vmatprep.mubr.bf16.mxu0 0
        %1557 = vmatmul.mubr.bf16.gmra.mxu0 %v650
        %v1558 = vpop.f32.mrf.mxu0
        %v1559 = vadd.f32 0.0, %v1558
        %v1560 = vpop.f32.mrf.mxu0
        %v1561 = vpop.f32.mrf.mxu0
        %v1562 = vadd.f32 0.0, %v1561
        %v1563 = vpop.f32.mrf.mxu0
        %1564 = vmatprep.mubr.bf16.mxu0 0
        %1565 = vmatmul.mubr.bf16.gmra.mxu0 %v651
        %v1566 = vpop.f32.mrf.mxu0
        %v1567 = vadd.f32 0.0, %v1566
        %v1568 = vpop.f32.mrf.mxu0
        %v1569 = vpop.f32.mrf.mxu0
        %v1570 = vadd.f32 0.0, %v1569
        %v1571 = vpop.f32.mrf.mxu0
        %1572 = vmatprep.mubr.bf16.mxu0 0
        %1573 = vmatmul.mubr.bf16.gmra.mxu0 %v652
        %v1574 = vpop.f32.mrf.mxu0
        %v1575 = vadd.f32 0.0, %v1574
        %v1576 = vpop.f32.mrf.mxu0
        %v1577 = vpop.f32.mrf.mxu0
        %v1578 = vadd.f32 0.0, %v1577
        %v1579 = vpop.f32.mrf.mxu0
        %1580 = vmatprep.mubr.bf16.mxu0 0
        %1581 = vmatmul.mubr.bf16.gmra.mxu0 %v653
        %v1582 = vpop.f32.mrf.mxu0
        %v1583 = vadd.f32 0.0, %v1582
        %v1584 = vpop.f32.mrf.mxu0
        %v1585 = vpop.f32.mrf.mxu0
        %v1586 = vadd.f32 0.0, %v1585
        %v1587 = vpop.f32.mrf.mxu0
        %1588 = vmatprep.mubr.bf16.mxu0 0
        %1589 = vmatmul.mubr.bf16.gmra.mxu0 %v654
        %v1590 = vpop.f32.mrf.mxu0
        %v1591 = vadd.f32 0.0, %v1590
        %v1592 = vpop.f32.mrf.mxu0
        %v1593 = vpop.f32.mrf.mxu0
        %v1594 = vadd.f32 0.0, %v1593
        %v1595 = vpop.f32.mrf.mxu0
        %1596 = vmatprep.mubr.bf16.mxu0 0
        %1597 = vmatmul.mubr.bf16.gmra.mxu0 %v655
        %v1598 = vpop.f32.mrf.mxu0
        %v1599 = vadd.f32 0.0, %v1598
        %v1600 = vpop.f32.mrf.mxu0
        %v1601 = vpop.f32.mrf.mxu0
        %v1602 = vadd.f32 0.0, %v1601
        %v1603 = vpop.f32.mrf.mxu0
        %1604 = vmatprep.mubr.bf16.mxu0 0
        %1605 = vmatmul.mubr.bf16.gmra.mxu0 %v656
        %v1606 = vpop.f32.mrf.mxu0
        %v1607 = vadd.f32 0.0, %v1606
        %v1608 = vpop.f32.mrf.mxu0
        %v1609 = vpop.f32.mrf.mxu0
        %v1610 = vadd.f32 0.0, %v1609
        %v1611 = vpop.f32.mrf.mxu0
        %1612 = vdwg.mxu0
        %v1613 = vpack.c.bf16 %v1554, %v1551
        %v1614 = vpack.c.bf16 %v1562, %v1559
        %v1615 = vpack.c.bf16 %v1570, %v1567
        %v1616 = vpack.c.bf16 %v1578, %v1575
        %v1617 = vpack.c.bf16 %v1586, %v1583
        %v1618 = vpack.c.bf16 %v1594, %v1591
        %v1619 = vpack.c.bf16 %v1602, %v1599
        %v1620 = vpack.c.bf16 %v1610, %v1607
        %s1621 = scalar_lea.vmem %s5, 64
        %v1622 = vld [vmem:[%s1621] sm:$0xf]
        %v1623 = vld [vmem:[%s1621 + $0x4] sm:$0xf]
        %v1624 = vld [vmem:[%s1621 + $0x8] sm:$0xf]
        %v1625 = vld [vmem:[%s1621 + $0xc] sm:$0xf]
        %v1630 = vunpack.c.l.b16 %v1622
        %v1631 = vunpack.c.l.b16 %v1623
        %v1632 = vunpack.c.l.b16 %v1624
        %v1633 = vunpack.c.l.b16 %v1625
        %v1634 = vpack.c.b16 %v1631, %v1630
        %v1635 = vpack.c.b16 %v1633, %v1632
        %v1639 = vsel %vm787, %v1613, 0
        %v1642 = vsel %vm787, %v1614, 0
        %v1645 = vsel %vm787, %v1615, 0
        %v1648 = vsel %vm787, %v1616, 0
        %v1651 = vsel %vm787, %v1617, 0
        %v1654 = vsel %vm787, %v1618, 0
        %v1657 = vsel %vm787, %v1619, 0
        %v1660 = vsel %vm787, %v1620, 0
        %1662 = vmatprep.subr.bf16.mxu0 0
        %1663 = vmatpush1.bf16.msra.mxu0 0
        %1664 = vmatprep.subr.bf16.mxu0 0
        %1665 = vmatpush1.bf16.msra.mxu0 0
        %1666 = vmatprep.subr.bf16.mxu0 0
        %1667 = vmatpush1.bf16.msra.mxu0 0
        %1668 = vmatprep.subr.bf16.mxu0 0
        %1669 = vmatpush1.bf16.msra.mxu0 0
        %1670 = vmatprep.subr.bf16.mxu0 0
        %1671 = vmatpush1.bf16.msra.mxu0 0
        %1672 = vmatprep.subr.bf16.mxu0 0
        %1673 = vmatpush1.bf16.msra.mxu0 0
        %1674 = vmatprep.subr.bf16.mxu0 0
        %1675 = vmatpush1.bf16.msra.mxu0 %v1635
        %1676 = vmatprep.subr.bf16.mxu0 0
        %1677 = vmatpush1.bf16.msra.mxu0 %v1634
        %1678 = vmatprep.subr.bf16.mxu0 0
        %1679 = vmatpush2.bf16.msra.mxu0 0
        %1680 = vmatprep.subr.bf16.mxu0 0
        %1681 = vmatpush2.bf16.msra.mxu0 0
        %1682 = vmatprep.subr.bf16.mxu0 0
        %1683 = vmatpush2.bf16.msra.mxu0 0
        %1684 = vmatprep.subr.bf16.mxu0 0
        %1685 = vmatpush2.bf16.msra.mxu0 0
        %1686 = vmatprep.subr.bf16.mxu0 0
        %1687 = vmatpush2.bf16.msra.mxu0 0
        %1688 = vmatprep.subr.bf16.mxu0 0
        %1689 = vmatpush2.bf16.msra.mxu0 0
        %1690 = vmatprep.subr.bf16.mxu0 0
        %1691 = vmatpush2.bf16.msra.mxu0 0
        %1692 = vmatprep.subr.bf16.mxu0 0
        %1693 = vmatpush2.bf16.msra.mxu0 0
        %1694 = vmatprep.mubr.bf16.mxu0 0
        %1695 = vmatmul.mubr.bf16.gmra.mxu0 %v1639
        %v1696 = vpop.f32.mrf.mxu0
        %v1697 = vadd.f32 0.0, %v1696
        %v1698 = vpop.f32.mrf.mxu0
        %v1699 = vpop.f32.mrf.mxu0
        %v1700 = vadd.f32 0.0, %v1699
        %v1701 = vpop.f32.mrf.mxu0
        %1702 = vmatprep.mubr.bf16.mxu0 0
        %1703 = vmatmul.mubr.bf16.gmra.mxu0 %v1642
        %v1704 = vpop.f32.mrf.mxu0
        %v1705 = vadd.f32 0.0, %v1704
        %v1706 = vpop.f32.mrf.mxu0
        %v1707 = vpop.f32.mrf.mxu0
        %v1708 = vadd.f32 0.0, %v1707
        %v1709 = vpop.f32.mrf.mxu0
        %1710 = vmatprep.mubr.bf16.mxu0 0
        %1711 = vmatmul.mubr.bf16.gmra.mxu0 %v1645
        %v1712 = vpop.f32.mrf.mxu0
        %v1713 = vadd.f32 0.0, %v1712
        %v1714 = vpop.f32.mrf.mxu0
        %v1715 = vpop.f32.mrf.mxu0
        %v1716 = vadd.f32 0.0, %v1715
        %v1717 = vpop.f32.mrf.mxu0
        %1718 = vmatprep.mubr.bf16.mxu0 0
        %1719 = vmatmul.mubr.bf16.gmra.mxu0 %v1648
        %v1720 = vpop.f32.mrf.mxu0
        %v1721 = vadd.f32 0.0, %v1720
        %v1722 = vpop.f32.mrf.mxu0
        %v1723 = vpop.f32.mrf.mxu0
        %v1724 = vadd.f32 0.0, %v1723
        %v1725 = vpop.f32.mrf.mxu0
        %1726 = vmatprep.mubr.bf16.mxu0 0
        %1727 = vmatmul.mubr.bf16.gmra.mxu0 %v1651
        %v1728 = vpop.f32.mrf.mxu0
        %v1729 = vadd.f32 0.0, %v1728
        %v1730 = vpop.f32.mrf.mxu0
        %v1731 = vpop.f32.mrf.mxu0
        %v1732 = vadd.f32 0.0, %v1731
        %v1733 = vpop.f32.mrf.mxu0
        %1734 = vmatprep.mubr.bf16.mxu0 0
        %1735 = vmatmul.mubr.bf16.gmra.mxu0 %v1654
        %v1736 = vpop.f32.mrf.mxu0
        %v1737 = vadd.f32 0.0, %v1736
        %v1738 = vpop.f32.mrf.mxu0
        %v1739 = vpop.f32.mrf.mxu0
        %v1740 = vadd.f32 0.0, %v1739
        %v1741 = vpop.f32.mrf.mxu0
        %1742 = vmatprep.mubr.bf16.mxu0 0
        %1743 = vmatmul.mubr.bf16.gmra.mxu0 %v1657
        %v1744 = vpop.f32.mrf.mxu0
        %v1745 = vadd.f32 0.0, %v1744
        %v1746 = vpop.f32.mrf.mxu0
        %v1747 = vpop.f32.mrf.mxu0
        %v1748 = vadd.f32 0.0, %v1747
        %v1749 = vpop.f32.mrf.mxu0
        %1750 = vmatprep.mubr.bf16.mxu0 0
        %1751 = vmatmul.mubr.bf16.gmra.mxu0 %v1660
        %v1752 = vpop.f32.mrf.mxu0
        %v1753 = vadd.f32 0.0, %v1752
        %v1754 = vpop.f32.mrf.mxu0
        %v1755 = vpop.f32.mrf.mxu0
        %v1756 = vadd.f32 0.0, %v1755
        %v1757 = vpop.f32.mrf.mxu0
        %1758 = vdwg.mxu0
        %v1763 = vunpack.c.l.b16 %v1512
        %v1764 = vunpack.c.l.b16 %v1513
        %v1765 = vunpack.c.l.b16 %v1514
        %v1766 = vunpack.c.l.b16 %v1515
        %v1767 = vpack.c.b16 %v1764, %v1763
        %v1768 = vpack.c.b16 %v1766, %v1765
        %v1772 = vsel %vm787, %v1503, 0
        %v1775 = vsel %vm787, %v1504, 0
        %v1778 = vsel %vm787, %v1505, 0
        %v1781 = vsel %vm787, %v1506, 0
        %v1784 = vsel %vm787, %v1507, 0
        %v1787 = vsel %vm787, %v1508, 0
        %v1790 = vsel %vm787, %v1509, 0
        %v1793 = vsel %vm787, %v1510, 0
        %1795 = vmatprep.subr.bf16.mxu0 0
        %1796 = vmatpush1.bf16.msra.mxu0 0
        %1797 = vmatprep.subr.bf16.mxu0 0
        %1798 = vmatpush1.bf16.msra.mxu0 0
        %1799 = vmatprep.subr.bf16.mxu0 0
        %1800 = vmatpush1.bf16.msra.mxu0 0
        %1801 = vmatprep.subr.bf16.mxu0 0
        %1802 = vmatpush1.bf16.msra.mxu0 0
        %1803 = vmatprep.subr.bf16.mxu0 0
        %1804 = vmatpush1.bf16.msra.mxu0 0
        %1805 = vmatprep.subr.bf16.mxu0 0
        %1806 = vmatpush1.bf16.msra.mxu0 0
        %1807 = vmatprep.subr.bf16.mxu0 0
        %1808 = vmatpush1.bf16.msra.mxu0 %v1768
        %1809 = vmatprep.subr.bf16.mxu0 0
        %1810 = vmatpush1.bf16.msra.mxu0 %v1767
        %1811 = vmatprep.subr.bf16.mxu0 0
        %1812 = vmatpush2.bf16.msra.mxu0 0
        %1813 = vmatprep.subr.bf16.mxu0 0
        %1814 = vmatpush2.bf16.msra.mxu0 0
        %1815 = vmatprep.subr.bf16.mxu0 0
        %1816 = vmatpush2.bf16.msra.mxu0 0
        %1817 = vmatprep.subr.bf16.mxu0 0
        %1818 = vmatpush2.bf16.msra.mxu0 0
        %1819 = vmatprep.subr.bf16.mxu0 0
        %1820 = vmatpush2.bf16.msra.mxu0 0
        %1821 = vmatprep.subr.bf16.mxu0 0
        %1822 = vmatpush2.bf16.msra.mxu0 0
        %1823 = vmatprep.subr.bf16.mxu0 0
        %1824 = vmatpush2.bf16.msra.mxu0 0
        %1825 = vmatprep.subr.bf16.mxu0 0
        %1826 = vmatpush2.bf16.msra.mxu0 0
        %1827 = vmatprep.mubr.bf16.mxu0 0
        %1828 = vmatmul.mubr.bf16.gmra.mxu0 %v1772
        %v1829 = vpop.f32.mrf.mxu0
        %v1830 = vadd.f32 %v1697, %v1829
        %v1831 = vpop.f32.mrf.mxu0
        %v1832 = vpop.f32.mrf.mxu0
        %v1833 = vadd.f32 %v1700, %v1832
        %v1834 = vpop.f32.mrf.mxu0
        %1835 = vmatprep.mubr.bf16.mxu0 0
        %1836 = vmatmul.mubr.bf16.gmra.mxu0 %v1775
        %v1837 = vpop.f32.mrf.mxu0
        %v1838 = vadd.f32 %v1705, %v1837
        %v1839 = vpop.f32.mrf.mxu0
        %v1840 = vpop.f32.mrf.mxu0
        %v1841 = vadd.f32 %v1708, %v1840
        %v1842 = vpop.f32.mrf.mxu0
        %1843 = vmatprep.mubr.bf16.mxu0 0
        %1844 = vmatmul.mubr.bf16.gmra.mxu0 %v1778
        %v1845 = vpop.f32.mrf.mxu0
        %v1846 = vadd.f32 %v1713, %v1845
        %v1847 = vpop.f32.mrf.mxu0
        %v1848 = vpop.f32.mrf.mxu0
        %v1849 = vadd.f32 %v1716, %v1848
        %v1850 = vpop.f32.mrf.mxu0
        %1851 = vmatprep.mubr.bf16.mxu0 0
        %1852 = vmatmul.mubr.bf16.gmra.mxu0 %v1781
        %v1853 = vpop.f32.mrf.mxu0
        %v1854 = vadd.f32 %v1721, %v1853
        %v1855 = vpop.f32.mrf.mxu0
        %v1856 = vpop.f32.mrf.mxu0
        %v1857 = vadd.f32 %v1724, %v1856
        %v1858 = vpop.f32.mrf.mxu0
        %1859 = vmatprep.mubr.bf16.mxu0 0
        %1860 = vmatmul.mubr.bf16.gmra.mxu0 %v1784
        %v1861 = vpop.f32.mrf.mxu0
        %v1862 = vadd.f32 %v1729, %v1861
        %v1863 = vpop.f32.mrf.mxu0
        %v1864 = vpop.f32.mrf.mxu0
        %v1865 = vadd.f32 %v1732, %v1864
        %v1866 = vpop.f32.mrf.mxu0
        %1867 = vmatprep.mubr.bf16.mxu0 0
        %1868 = vmatmul.mubr.bf16.gmra.mxu0 %v1787
        %v1869 = vpop.f32.mrf.mxu0
        %v1870 = vadd.f32 %v1737, %v1869
        %v1871 = vpop.f32.mrf.mxu0
        %v1872 = vpop.f32.mrf.mxu0
        %v1873 = vadd.f32 %v1740, %v1872
        %v1874 = vpop.f32.mrf.mxu0
        %1875 = vmatprep.mubr.bf16.mxu0 0
        %1876 = vmatmul.mubr.bf16.gmra.mxu0 %v1790
        %v1877 = vpop.f32.mrf.mxu0
        %v1878 = vadd.f32 %v1745, %v1877
        %v1879 = vpop.f32.mrf.mxu0
        %v1880 = vpop.f32.mrf.mxu0
        %v1881 = vadd.f32 %v1748, %v1880
        %v1882 = vpop.f32.mrf.mxu0
        %1883 = vmatprep.mubr.bf16.mxu0 0
        %1884 = vmatmul.mubr.bf16.gmra.mxu0 %v1793
        %v1885 = vpop.f32.mrf.mxu0
        %v1886 = vadd.f32 %v1753, %v1885
        %v1887 = vpop.f32.mrf.mxu0
        %v1888 = vpop.f32.mrf.mxu0
        %v1889 = vadd.f32 %v1756, %v1888
        %v1890 = vpop.f32.mrf.mxu0
        %1891 = vdwg.mxu0
        %1892 = vmatprep.subr.bf16.mxu0 0
        %1893 = vmatpush1.bf16.msra.mxu0 %v1620
        %1894 = vmatprep.subr.bf16.mxu0 0
        %1895 = vmatpush1.bf16.msra.mxu0 %v1619
        %1896 = vmatprep.subr.bf16.mxu0 0
        %1897 = vmatpush1.bf16.msra.mxu0 %v1618
        %1898 = vmatprep.subr.bf16.mxu0 0
        %1899 = vmatpush1.bf16.msra.mxu0 %v1617
        %1900 = vmatprep.subr.bf16.mxu0 0
        %1901 = vmatpush1.bf16.msra.mxu0 %v1616
        %1902 = vmatprep.subr.bf16.mxu0 0
        %1903 = vmatpush1.bf16.msra.mxu0 %v1615
        %1904 = vmatprep.subr.bf16.mxu0 0
        %1905 = vmatpush1.bf16.msra.mxu0 %v1614
        %1906 = vmatprep.subr.bf16.mxu0 0
        %1907 = vmatpush1.bf16.msra.mxu0 %v1613
        %1908 = vmatprep.subr.bf16.mxu0 0
        %1909 = vmatpush2.bf16.msra.mxu0 0
        %1910 = vmatprep.subr.bf16.mxu0 0
        %1911 = vmatpush2.bf16.msra.mxu0 0
        %1912 = vmatprep.subr.bf16.mxu0 0
        %1913 = vmatpush2.bf16.msra.mxu0 0
        %1914 = vmatprep.subr.bf16.mxu0 0
        %1915 = vmatpush2.bf16.msra.mxu0 0
        %1916 = vmatprep.subr.bf16.mxu0 0
        %1917 = vmatpush2.bf16.msra.mxu0 0
        %1918 = vmatprep.subr.bf16.mxu0 0
        %1919 = vmatpush2.bf16.msra.mxu0 0
        %1920 = vmatprep.subr.bf16.mxu0 0
        %1921 = vmatpush2.bf16.msra.mxu0 0
        %1922 = vmatprep.subr.bf16.mxu0 0
        %1923 = vmatpush2.bf16.msra.mxu0 0
        %1924 = vmatprep.mubr.bf16.mxu0 0
        %1925 = vmatmul.mubr.bf16.gmra.mxu0 %v649
        %v1926 = vpop.f32.mrf.mxu0
        %v1927 = vadd.f32 0.0, %v1926
        %v1928 = vpop.f32.mrf.mxu0
        %v1929 = vpop.f32.mrf.mxu0
        %v1930 = vadd.f32 0.0, %v1929
        %v1931 = vpop.f32.mrf.mxu0
        %1932 = vmatprep.mubr.bf16.mxu0 0
        %1933 = vmatmul.mubr.bf16.gmra.mxu0 %v650
        %v1934 = vpop.f32.mrf.mxu0
        %v1935 = vadd.f32 0.0, %v1934
        %v1936 = vpop.f32.mrf.mxu0
        %v1937 = vpop.f32.mrf.mxu0
        %v1938 = vadd.f32 0.0, %v1937
        %v1939 = vpop.f32.mrf.mxu0
        %1940 = vmatprep.mubr.bf16.mxu0 0
        %1941 = vmatmul.mubr.bf16.gmra.mxu0 %v651
        %v1942 = vpop.f32.mrf.mxu0
        %v1943 = vadd.f32 0.0, %v1942
        %v1944 = vpop.f32.mrf.mxu0
        %v1945 = vpop.f32.mrf.mxu0
        %v1946 = vadd.f32 0.0, %v1945
        %v1947 = vpop.f32.mrf.mxu0
        %1948 = vmatprep.mubr.bf16.mxu0 0
        %1949 = vmatmul.mubr.bf16.gmra.mxu0 %v652
        %v1950 = vpop.f32.mrf.mxu0
        %v1951 = vadd.f32 0.0, %v1950
        %v1952 = vpop.f32.mrf.mxu0
        %v1953 = vpop.f32.mrf.mxu0
        %v1954 = vadd.f32 0.0, %v1953
        %v1955 = vpop.f32.mrf.mxu0
        %1956 = vmatprep.mubr.bf16.mxu0 0
        %1957 = vmatmul.mubr.bf16.gmra.mxu0 %v653
        %v1958 = vpop.f32.mrf.mxu0
        %v1959 = vadd.f32 0.0, %v1958
        %v1960 = vpop.f32.mrf.mxu0
        %v1961 = vpop.f32.mrf.mxu0
        %v1962 = vadd.f32 0.0, %v1961
        %v1963 = vpop.f32.mrf.mxu0
        %1964 = vmatprep.mubr.bf16.mxu0 0
        %1965 = vmatmul.mubr.bf16.gmra.mxu0 %v654
        %v1966 = vpop.f32.mrf.mxu0
        %v1967 = vadd.f32 0.0, %v1966
        %v1968 = vpop.f32.mrf.mxu0
        %v1969 = vpop.f32.mrf.mxu0
        %v1970 = vadd.f32 0.0, %v1969
        %v1971 = vpop.f32.mrf.mxu0
        %1972 = vmatprep.mubr.bf16.mxu0 0
        %1973 = vmatmul.mubr.bf16.gmra.mxu0 %v655
        %v1974 = vpop.f32.mrf.mxu0
        %v1975 = vadd.f32 0.0, %v1974
        %v1976 = vpop.f32.mrf.mxu0
        %v1977 = vpop.f32.mrf.mxu0
        %v1978 = vadd.f32 0.0, %v1977
        %v1979 = vpop.f32.mrf.mxu0
        %1980 = vmatprep.mubr.bf16.mxu0 0
        %1981 = vmatmul.mubr.bf16.gmra.mxu0 %v656
        %v1982 = vpop.f32.mrf.mxu0
        %v1983 = vadd.f32 0.0, %v1982
        %v1984 = vpop.f32.mrf.mxu0
        %v1985 = vpop.f32.mrf.mxu0
        %v1986 = vadd.f32 0.0, %v1985
        %v1987 = vpop.f32.mrf.mxu0
        %1988 = vdwg.mxu0
        %v1989 = vmul.f32 %v1927, 2.0
        %v1990 = vmul.f32 %v1930, 2.0
        %v1991 = vmul.f32 %v1935, 2.0
        %v1992 = vmul.f32 %v1938, 2.0
        %v1993 = vmul.f32 %v1943, 2.0
        %v1994 = vmul.f32 %v1946, 2.0
        %v1995 = vmul.f32 %v1951, 2.0
        %v1996 = vmul.f32 %v1954, 2.0
        %v1997 = vmul.f32 %v1959, 2.0
        %v1998 = vmul.f32 %v1962, 2.0
        %v1999 = vmul.f32 %v1967, 2.0
        %v2000 = vmul.f32 %v1970, 2.0
        %v2001 = vmul.f32 %v1975, 2.0
        %v2002 = vmul.f32 %v1978, 2.0
        %v2003 = vmul.f32 %v1983, 2.0
        %v2004 = vmul.f32 %v1986, 2.0
        %v2005 = vsub.f32 %v1989, %v1485
        %v2006 = vsub.f32 %v1990, %v1486
        %v2007 = vsub.f32 %v1991, %v1487
        %v2008 = vsub.f32 %v1992, %v1488
        %v2009 = vsub.f32 %v1993, %v1489
        %v2010 = vsub.f32 %v1994, %v1490
        %v2011 = vsub.f32 %v1995, %v1491
        %v2012 = vsub.f32 %v1996, %v1492
        %v2013 = vsub.f32 %v1997, %v1493
        %v2014 = vsub.f32 %v1998, %v1494
        %v2015 = vsub.f32 %v1999, %v1495
        %v2016 = vsub.f32 %v2000, %v1496
        %v2017 = vsub.f32 %v2001, %v1497
        %v2018 = vsub.f32 %v2002, %v1498
        %v2019 = vsub.f32 %v2003, %v1499
        %v2020 = vsub.f32 %v2004, %v1500
        %v2021 = vpack.c.bf16 %v2006, %v2005
        %v2022 = vpack.c.bf16 %v2008, %v2007
        %v2023 = vpack.c.bf16 %v2010, %v2009
        %v2024 = vpack.c.bf16 %v2012, %v2011
        %v2025 = vpack.c.bf16 %v2014, %v2013
        %v2026 = vpack.c.bf16 %v2016, %v2015
        %v2027 = vpack.c.bf16 %v2018, %v2017
        %v2028 = vpack.c.bf16 %v2020, %v2019
        %s2029 = scalar_lea.vmem %s5, 80
        %v2030 = vld [vmem:[%s2029] sm:$0xf]
        %v2031 = vld [vmem:[%s2029 + $0x4] sm:$0xf]
        %v2032 = vld [vmem:[%s2029 + $0x8] sm:$0xf]
        %v2033 = vld [vmem:[%s2029 + $0xc] sm:$0xf]
        %v2038 = vunpack.c.l.b16 %v2030
        %v2039 = vunpack.c.l.b16 %v2031
        %v2040 = vunpack.c.l.b16 %v2032
        %v2041 = vunpack.c.l.b16 %v2033
        %v2042 = vpack.c.b16 %v2039, %v2038
        %v2043 = vpack.c.b16 %v2041, %v2040
        %v2047 = vsel %vm787, %v2021, 0
        %v2050 = vsel %vm787, %v2022, 0
        %v2053 = vsel %vm787, %v2023, 0
        %v2056 = vsel %vm787, %v2024, 0
        %v2059 = vsel %vm787, %v2025, 0
        %v2062 = vsel %vm787, %v2026, 0
        %v2065 = vsel %vm787, %v2027, 0
        %v2068 = vsel %vm787, %v2028, 0
        %2070 = vmatprep.subr.bf16.mxu0 0
        %2071 = vmatpush1.bf16.msra.mxu0 0
        %2072 = vmatprep.subr.bf16.mxu0 0
        %2073 = vmatpush1.bf16.msra.mxu0 0
        %2074 = vmatprep.subr.bf16.mxu0 0
        %2075 = vmatpush1.bf16.msra.mxu0 0
        %2076 = vmatprep.subr.bf16.mxu0 0
        %2077 = vmatpush1.bf16.msra.mxu0 0
        %2078 = vmatprep.subr.bf16.mxu0 0
        %2079 = vmatpush1.bf16.msra.mxu0 0
        %2080 = vmatprep.subr.bf16.mxu0 0
        %2081 = vmatpush1.bf16.msra.mxu0 0
        %2082 = vmatprep.subr.bf16.mxu0 0
        %2083 = vmatpush1.bf16.msra.mxu0 %v2043
        %2084 = vmatprep.subr.bf16.mxu0 0
        %2085 = vmatpush1.bf16.msra.mxu0 %v2042
        %2086 = vmatprep.subr.bf16.mxu0 0
        %2087 = vmatpush2.bf16.msra.mxu0 0
        %2088 = vmatprep.subr.bf16.mxu0 0
        %2089 = vmatpush2.bf16.msra.mxu0 0
        %2090 = vmatprep.subr.bf16.mxu0 0
        %2091 = vmatpush2.bf16.msra.mxu0 0
        %2092 = vmatprep.subr.bf16.mxu0 0
        %2093 = vmatpush2.bf16.msra.mxu0 0
        %2094 = vmatprep.subr.bf16.mxu0 0
        %2095 = vmatpush2.bf16.msra.mxu0 0
        %2096 = vmatprep.subr.bf16.mxu0 0
        %2097 = vmatpush2.bf16.msra.mxu0 0
        %2098 = vmatprep.subr.bf16.mxu0 0
        %2099 = vmatpush2.bf16.msra.mxu0 0
        %2100 = vmatprep.subr.bf16.mxu0 0
        %2101 = vmatpush2.bf16.msra.mxu0 0
        %2102 = vmatprep.mubr.bf16.mxu0 0
        %2103 = vmatmul.mubr.bf16.gmra.mxu0 %v2047
        %v2104 = vpop.f32.mrf.mxu0
        %v2105 = vadd.f32 0.0, %v2104
        %v2106 = vpop.f32.mrf.mxu0
        %v2107 = vpop.f32.mrf.mxu0
        %v2108 = vadd.f32 0.0, %v2107
        %v2109 = vpop.f32.mrf.mxu0
        %2110 = vmatprep.mubr.bf16.mxu0 0
        %2111 = vmatmul.mubr.bf16.gmra.mxu0 %v2050
        %v2112 = vpop.f32.mrf.mxu0
        %v2113 = vadd.f32 0.0, %v2112
        %v2114 = vpop.f32.mrf.mxu0
        %v2115 = vpop.f32.mrf.mxu0
        %v2116 = vadd.f32 0.0, %v2115
        %v2117 = vpop.f32.mrf.mxu0
        %2118 = vmatprep.mubr.bf16.mxu0 0
        %2119 = vmatmul.mubr.bf16.gmra.mxu0 %v2053
        %v2120 = vpop.f32.mrf.mxu0
        %v2121 = vadd.f32 0.0, %v2120
        %v2122 = vpop.f32.mrf.mxu0
        %v2123 = vpop.f32.mrf.mxu0
        %v2124 = vadd.f32 0.0, %v2123
        %v2125 = vpop.f32.mrf.mxu0
        %2126 = vmatprep.mubr.bf16.mxu0 0
        %2127 = vmatmul.mubr.bf16.gmra.mxu0 %v2056
        %v2128 = vpop.f32.mrf.mxu0
        %v2129 = vadd.f32 0.0, %v2128
        %v2130 = vpop.f32.mrf.mxu0
        %v2131 = vpop.f32.mrf.mxu0
        %v2132 = vadd.f32 0.0, %v2131
        %v2133 = vpop.f32.mrf.mxu0
        %2134 = vmatprep.mubr.bf16.mxu0 0
        %2135 = vmatmul.mubr.bf16.gmra.mxu0 %v2059
        %v2136 = vpop.f32.mrf.mxu0
        %v2137 = vadd.f32 0.0, %v2136
        %v2138 = vpop.f32.mrf.mxu0
        %v2139 = vpop.f32.mrf.mxu0
        %v2140 = vadd.f32 0.0, %v2139
        %v2141 = vpop.f32.mrf.mxu0
        %2142 = vmatprep.mubr.bf16.mxu0 0
        %2143 = vmatmul.mubr.bf16.gmra.mxu0 %v2062
        %v2144 = vpop.f32.mrf.mxu0
        %v2145 = vadd.f32 0.0, %v2144
        %v2146 = vpop.f32.mrf.mxu0
        %v2147 = vpop.f32.mrf.mxu0
        %v2148 = vadd.f32 0.0, %v2147
        %v2149 = vpop.f32.mrf.mxu0
        %2150 = vmatprep.mubr.bf16.mxu0 0
        %2151 = vmatmul.mubr.bf16.gmra.mxu0 %v2065
        %v2152 = vpop.f32.mrf.mxu0
        %v2153 = vadd.f32 0.0, %v2152
        %v2154 = vpop.f32.mrf.mxu0
        %v2155 = vpop.f32.mrf.mxu0
        %v2156 = vadd.f32 0.0, %v2155
        %v2157 = vpop.f32.mrf.mxu0
        %2158 = vmatprep.mubr.bf16.mxu0 0
        %2159 = vmatmul.mubr.bf16.gmra.mxu0 %v2068
        %v2160 = vpop.f32.mrf.mxu0
        %v2161 = vadd.f32 0.0, %v2160
        %v2162 = vpop.f32.mrf.mxu0
        %v2163 = vpop.f32.mrf.mxu0
        %v2164 = vadd.f32 0.0, %v2163
        %v2165 = vpop.f32.mrf.mxu0
        %2166 = vdwg.mxu0
        %v2167 = vadd.f32 %v1830, %v2105
        %v2168 = vadd.f32 %v1833, %v2108
        %v2169 = vadd.f32 %v1838, %v2113
        %v2170 = vadd.f32 %v1841, %v2116
        %v2171 = vadd.f32 %v1846, %v2121
        %v2172 = vadd.f32 %v1849, %v2124
        %v2173 = vadd.f32 %v1854, %v2129
        %v2174 = vadd.f32 %v1857, %v2132
        %v2175 = vadd.f32 %v1862, %v2137
        %v2176 = vadd.f32 %v1865, %v2140
        %v2177 = vadd.f32 %v1870, %v2145
        %v2178 = vadd.f32 %v1873, %v2148
        %v2179 = vadd.f32 %v1878, %v2153
        %v2180 = vadd.f32 %v1881, %v2156
        %v2181 = vadd.f32 %v1886, %v2161
        %v2182 = vadd.f32 %v1889, %v2164
        %v2183 = vlaneseq
        %v2184 = vshrl.u32 %v2183, 7
        %v2185 = vsub.s32 0, %v2184
        %v2186 = vrot.slane %v1501, %v2185
        %v2187 = vadd.f32 %v2167, %v2186
        %v2188 = vadd.f32 %v2168, %v2186
        %v2189 = vadd.f32 %v2169, %v2186
        %v2190 = vadd.f32 %v2170, %v2186
        %v2191 = vadd.f32 %v2171, %v2186
        %v2192 = vadd.f32 %v2172, %v2186
        %v2193 = vadd.f32 %v2173, %v2186
        %v2194 = vadd.f32 %v2174, %v2186
        %v2195 = vadd.f32 %v2175, %v2186
        %v2196 = vadd.f32 %v2176, %v2186
        %v2197 = vadd.f32 %v2177, %v2186
        %v2198 = vadd.f32 %v2178, %v2186
        %v2199 = vadd.f32 %v2179, %v2186
        %v2200 = vadd.f32 %v2180, %v2186
        %v2201 = vadd.f32 %v2181, %v2186
        %v2202 = vadd.f32 %v2182, %v2186
        %v2203 = vmul.f32 %v2187, %v1356
        %v2204 = vmul.f32 %v2188, %v1361
        %v2205 = vmul.f32 %v2189, %v1366
        %v2206 = vmul.f32 %v2190, %v1371
        %v2207 = vmul.f32 %v2191, %v1376
        %v2208 = vmul.f32 %v2192, %v1381
        %v2209 = vmul.f32 %v2193, %v1386
        %v2210 = vmul.f32 %v2194, %v1391
        %v2211 = vmul.f32 %v2195, %v1396
        %v2212 = vmul.f32 %v2196, %v1401
        %v2213 = vmul.f32 %v2197, %v1406
        %v2214 = vmul.f32 %v2198, %v1411
        %v2215 = vmul.f32 %v2199, %v1416
        %v2216 = vmul.f32 %v2200, %v1421
        %v2217 = vmul.f32 %v2201, %v1426
        %v2218 = vmul.f32 %v2202, %v1431
        %v2219 = vlaneseq
        %v2220 = vshrl.u32 %v2219, 7
        %v2221 = vsub.s32 0, %v2220
        %v2222 = vrot.slane %v1502, %v2221
        %v2223 = vadd.f32 %v2203, %v2222
        %v2224 = vadd.f32 %v2204, %v2222
        %v2225 = vadd.f32 %v2205, %v2222
        %v2226 = vadd.f32 %v2206, %v2222
        %v2227 = vadd.f32 %v2207, %v2222
        %v2228 = vadd.f32 %v2208, %v2222
        %v2229 = vadd.f32 %v2209, %v2222
        %v2230 = vadd.f32 %v2210, %v2222
        %v2231 = vadd.f32 %v2211, %v2222
        %v2232 = vadd.f32 %v2212, %v2222
        %v2233 = vadd.f32 %v2213, %v2222
        %v2234 = vadd.f32 %v2214, %v2222
        %v2235 = vadd.f32 %v2215, %v2222
        %v2236 = vadd.f32 %v2216, %v2222
        %v2237 = vadd.f32 %v2217, %v2222
        %v2238 = vadd.f32 %v2218, %v2222
        %v2239 = vmax.f32 %v2223, 0.0
        %v2240 = vmax.f32 %v2224, 0.0
        %v2241 = vmax.f32 %v2225, 0.0
        %v2242 = vmax.f32 %v2226, 0.0
        %v2243 = vmax.f32 %v2227, 0.0
        %v2244 = vmax.f32 %v2228, 0.0
        %v2245 = vmax.f32 %v2229, 0.0
        %v2246 = vmax.f32 %v2230, 0.0
        %v2247 = vmax.f32 %v2231, 0.0
        %v2248 = vmax.f32 %v2232, 0.0
        %v2249 = vmax.f32 %v2233, 0.0
        %v2250 = vmax.f32 %v2234, 0.0
        %v2251 = vmax.f32 %v2235, 0.0
        %v2252 = vmax.f32 %v2236, 0.0
        %v2253 = vmax.f32 %v2237, 0.0
        %v2254 = vmax.f32 %v2238, 0.0
        %v2255 = vadd.f32 %v1485, %v2239
        %v2256 = vadd.f32 %v1486, %v2240
        %v2257 = vadd.f32 %v1487, %v2241
        %v2258 = vadd.f32 %v1488, %v2242
        %v2259 = vadd.f32 %v1489, %v2243
        %v2260 = vadd.f32 %v1490, %v2244
        %v2261 = vadd.f32 %v1491, %v2245
        %v2262 = vadd.f32 %v1492, %v2246
        %v2263 = vadd.f32 %v1493, %v2247
        %v2264 = vadd.f32 %v1494, %v2248
        %v2265 = vadd.f32 %v1495, %v2249
        %v2266 = vadd.f32 %v1496, %v2250
        %v2267 = vadd.f32 %v1497, %v2251
        %v2268 = vadd.f32 %v1498, %v2252
        %v2269 = vadd.f32 %v1499, %v2253
        %v2270 = vadd.f32 %v1500, %v2254
        %v2271 = vld [vmem:[%s3] sm:$0xf]
        %v2272 = vpack.c.bf16 %v2256, %v2255
        %v2273 = vpack.c.bf16 %v2258, %v2257
        %v2274 = vpack.c.bf16 %v2260, %v2259
        %v2275 = vpack.c.bf16 %v2262, %v2261
        %v2276 = vpack.c.bf16 %v2264, %v2263
        %v2277 = vpack.c.bf16 %v2266, %v2265
        %v2278 = vpack.c.bf16 %v2268, %v2267
        %v2279 = vpack.c.bf16 %v2270, %v2269
        %2280 = vmatprep.subr.bf16.mxu0 0
        %2281 = vmatpush1.bf16.msra.mxu0 %v2279
        %2282 = vmatprep.subr.bf16.mxu0 0
        %2283 = vmatpush1.bf16.msra.mxu0 %v2278
        %2284 = vmatprep.subr.bf16.mxu0 0
        %2285 = vmatpush1.bf16.msra.mxu0 %v2277
        %2286 = vmatprep.subr.bf16.mxu0 0
        %2287 = vmatpush1.bf16.msra.mxu0 %v2276
        %2288 = vmatprep.subr.bf16.mxu0 0
        %2289 = vmatpush1.bf16.msra.mxu0 %v2275
        %2290 = vmatprep.subr.bf16.mxu0 0
        %2291 = vmatpush1.bf16.msra.mxu0 %v2274
        %2292 = vmatprep.subr.bf16.mxu0 0
        %2293 = vmatpush1.bf16.msra.mxu0 %v2273
        %2294 = vmatprep.subr.bf16.mxu0 0
        %2295 = vmatpush1.bf16.msra.mxu0 %v2272
        %2296 = vmatprep.subr.bf16.mxu0 0
        %2297 = vmatpush2.bf16.msra.mxu0 0
        %2298 = vmatprep.subr.bf16.mxu0 0
        %2299 = vmatpush2.bf16.msra.mxu0 0
        %2300 = vmatprep.subr.bf16.mxu0 0
        %2301 = vmatpush2.bf16.msra.mxu0 0
        %2302 = vmatprep.subr.bf16.mxu0 0
        %2303 = vmatpush2.bf16.msra.mxu0 0
        %2304 = vmatprep.subr.bf16.mxu0 0
        %2305 = vmatpush2.bf16.msra.mxu0 0
        %2306 = vmatprep.subr.bf16.mxu0 0
        %2307 = vmatpush2.bf16.msra.mxu0 0
        %2308 = vmatprep.subr.bf16.mxu0 0
        %2309 = vmatpush2.bf16.msra.mxu0 0
        %2310 = vmatprep.subr.bf16.mxu0 0
        %2311 = vmatpush2.bf16.msra.mxu0 0
        %2312 = vmatprep.mubr.bf16.mxu0 0
        %2313 = vmatmul.mubr.bf16.gmra.mxu0 %v2271
        %v2314 = vpop.f32.mrf.mxu0
        %v2315 = vadd.f32 0.0, %v2314
        %v2316 = vpop.f32.mrf.mxu0
        %v2317 = vpop.f32.mrf.mxu0
        %v2318 = vpop.f32.mrf.mxu0
        %2319 = vdwg.mxu0
        %v2320 = vld [vmem:[%s7 + $0x5] sm:$0x1]
        %v2321 = vld [vmem:[%s7 + $0x6] sm:$0x1]
        %v2322 = vld [vmem:[%s7 + $0x7] sm:$0x1]
        %v2323 = vpack.c.bf16 %v2315, %v2315
        %v2324 = vld [vmem:[%s6] sm:$0xf]
        %v2325 = vld [vmem:[%s6 + $0x4] sm:$0xf]
        %v2326 = vld [vmem:[%s6 + $0x8] sm:$0xf]
        %v2327 = vld [vmem:[%s6 + $0xc] sm:$0xf]
        %v2328 = vlaneseq
        %v2329 = vshrl.u32 %v2328, 7
        %v2330 = vsub.s32 0, %v2329
        %v2331 = vrot.slane %v2320, %v2330
        %v2336 = vunpack.c.l.b16 %v2324
        %v2337 = vunpack.c.l.b16 %v2325
        %v2338 = vunpack.c.l.b16 %v2326
        %v2339 = vunpack.c.l.b16 %v2327
        %v2340 = vpack.c.b16 %v2337, %v2336
        %v2341 = vpack.c.b16 %v2339, %v2338
        %v2345 = vsel %vm787, %v2323, 0
        %2347 = vmatprep.subr.bf16.mxu0 0
        %2348 = vmatpush1.bf16.msra.mxu0 0
        %2349 = vmatprep.subr.bf16.mxu0 0
        %2350 = vmatpush1.bf16.msra.mxu0 0
        %2351 = vmatprep.subr.bf16.mxu0 0
        %2352 = vmatpush1.bf16.msra.mxu0 0
        %2353 = vmatprep.subr.bf16.mxu0 0
        %2354 = vmatpush1.bf16.msra.mxu0 0
        %2355 = vmatprep.subr.bf16.mxu0 0
        %2356 = vmatpush1.bf16.msra.mxu0 0
        %2357 = vmatprep.subr.bf16.mxu0 0
        %2358 = vmatpush1.bf16.msra.mxu0 0
        %2359 = vmatprep.subr.bf16.mxu0 0
        %2360 = vmatpush1.bf16.msra.mxu0 %v2341
        %2361 = vmatprep.subr.bf16.mxu0 0
        %2362 = vmatpush1.bf16.msra.mxu0 %v2340
        %2363 = vmatprep.subr.bf16.mxu0 0
        %2364 = vmatpush2.bf16.msra.mxu0 0
        %2365 = vmatprep.subr.bf16.mxu0 0
        %2366 = vmatpush2.bf16.msra.mxu0 0
        %2367 = vmatprep.subr.bf16.mxu0 0
        %2368 = vmatpush2.bf16.msra.mxu0 0
        %2369 = vmatprep.subr.bf16.mxu0 0
        %2370 = vmatpush2.bf16.msra.mxu0 0
        %2371 = vmatprep.subr.bf16.mxu0 0
        %2372 = vmatpush2.bf16.msra.mxu0 0
        %2373 = vmatprep.subr.bf16.mxu0 0
        %2374 = vmatpush2.bf16.msra.mxu0 0
        %2375 = vmatprep.subr.bf16.mxu0 0
        %2376 = vmatpush2.bf16.msra.mxu0 0
        %2377 = vmatprep.subr.bf16.mxu0 0
        %2378 = vmatpush2.bf16.msra.mxu0 0
        %2379 = vmatprep.mubr.bf16.mxu0 0
        %2380 = vmatmul.mubr.bf16.gmra.mxu0 %v2345
        %v2381 = vpop.f32.mrf.mxu0
        %v2382 = vadd.f32 %v2331, %v2381
        %v2383 = vpop.f32.mrf.mxu0
        %v2384 = vpop.f32.mrf.mxu0
        %v2385 = vpop.f32.mrf.mxu0
        %2386 = vdwg.mxu0
        %v2387 = vmax.f32 %v2382, 0.0
        %v2388 = vpack.c.bf16 %v2387, %v2387
        %s2389 = scalar_lea.vmem %s6, 16
        %v2390 = vld [vmem:[%s2389] sm:$0xf]
        %v2391 = vld [vmem:[%s2389 + $0x4] sm:$0xf]
        %v2392 = vld [vmem:[%s2389 + $0x8] sm:$0xf]
        %v2393 = vld [vmem:[%s2389 + $0xc] sm:$0xf]
        %v2394 = vlaneseq
        %v2395 = vshrl.u32 %v2394, 7
        %v2396 = vsub.s32 0, %v2395
        %v2397 = vrot.slane %v2321, %v2396
        %v2402 = vunpack.c.l.b16 %v2390
        %v2403 = vunpack.c.l.b16 %v2391
        %v2404 = vunpack.c.l.b16 %v2392
        %v2405 = vunpack.c.l.b16 %v2393
        %v2406 = vpack.c.b16 %v2403, %v2402
        %v2407 = vpack.c.b16 %v2405, %v2404
        %v2411 = vsel %vm787, %v2388, 0
        %2413 = vmatprep.subr.bf16.mxu0 0
        %2414 = vmatpush1.bf16.msra.mxu0 0
        %2415 = vmatprep.subr.bf16.mxu0 0
        %2416 = vmatpush1.bf16.msra.mxu0 0
        %2417 = vmatprep.subr.bf16.mxu0 0
        %2418 = vmatpush1.bf16.msra.mxu0 0
        %2419 = vmatprep.subr.bf16.mxu0 0
        %2420 = vmatpush1.bf16.msra.mxu0 0
        %2421 = vmatprep.subr.bf16.mxu0 0
        %2422 = vmatpush1.bf16.msra.mxu0 0
        %2423 = vmatprep.subr.bf16.mxu0 0
        %2424 = vmatpush1.bf16.msra.mxu0 0
        %2425 = vmatprep.subr.bf16.mxu0 0
        %2426 = vmatpush1.bf16.msra.mxu0 %v2407
        %2427 = vmatprep.subr.bf16.mxu0 0
        %2428 = vmatpush1.bf16.msra.mxu0 %v2406
        %2429 = vmatprep.subr.bf16.mxu0 0
        %2430 = vmatpush2.bf16.msra.mxu0 0
        %2431 = vmatprep.subr.bf16.mxu0 0
        %2432 = vmatpush2.bf16.msra.mxu0 0
        %2433 = vmatprep.subr.bf16.mxu0 0
        %2434 = vmatpush2.bf16.msra.mxu0 0
        %2435 = vmatprep.subr.bf16.mxu0 0
        %2436 = vmatpush2.bf16.msra.mxu0 0
        %2437 = vmatprep.subr.bf16.mxu0 0
        %2438 = vmatpush2.bf16.msra.mxu0 0
        %2439 = vmatprep.subr.bf16.mxu0 0
        %2440 = vmatpush2.bf16.msra.mxu0 0
        %2441 = vmatprep.subr.bf16.mxu0 0
        %2442 = vmatpush2.bf16.msra.mxu0 0
        %2443 = vmatprep.subr.bf16.mxu0 0
        %2444 = vmatpush2.bf16.msra.mxu0 0
        %2445 = vmatprep.mubr.bf16.mxu0 0
        %2446 = vmatmul.mubr.bf16.gmra.mxu0 %v2411
        %v2447 = vpop.f32.mrf.mxu0
        %v2448 = vadd.f32 %v2397, %v2447
        %v2449 = vpop.f32.mrf.mxu0
        %v2450 = vpop.f32.mrf.mxu0
        %v2451 = vpop.f32.mrf.mxu0
        %2452 = vdwg.mxu0
        %v2453 = vmax.f32 %v2448, 0.0
        %v2454 = vpack.c.bf16 %v2453, %v2453
        %s2455 = scalar_lea.vmem %s6, 32
        %v2456 = vld [vmem:[%s2455] sm:$0xf]
        %v2457 = vld [vmem:[%s2455 + $0x4] sm:$0xf]
        %v2458 = vld [vmem:[%s2455 + $0x8] sm:$0xf]
        %v2459 = vld [vmem:[%s2455 + $0xc] sm:$0xf]
        %v2460 = vlaneseq
        %v2461 = vshrl.u32 %v2460, 7
        %v2462 = vsub.s32 0, %v2461
        %v2463 = vrot.slane %v2322, %v2462
        %v2468 = vunpack.c.l.b16 %v2456
        %v2469 = vunpack.c.l.b16 %v2457
        %v2470 = vunpack.c.l.b16 %v2458
        %v2471 = vunpack.c.l.b16 %v2459
        %v2472 = vpack.c.b16 %v2469, %v2468
        %v2473 = vpack.c.b16 %v2471, %v2470
        %v2477 = vsel %vm787, %v2454, 0
        %2479 = vmatprep.subr.bf16.mxu0 0
        %2480 = vmatpush1.bf16.msra.mxu0 0
        %2481 = vmatprep.subr.bf16.mxu0 0
        %2482 = vmatpush1.bf16.msra.mxu0 0
        %2483 = vmatprep.subr.bf16.mxu0 0
        %2484 = vmatpush1.bf16.msra.mxu0 0
        %2485 = vmatprep.subr.bf16.mxu0 0
        %2486 = vmatpush1.bf16.msra.mxu0 0
        %2487 = vmatprep.subr.bf16.mxu0 0
        %2488 = vmatpush1.bf16.msra.mxu0 0
        %2489 = vmatprep.subr.bf16.mxu0 0
        %2490 = vmatpush1.bf16.msra.mxu0 0
        %2491 = vmatprep.subr.bf16.mxu0 0
        %2492 = vmatpush1.bf16.msra.mxu0 %v2473
        %2493 = vmatprep.subr.bf16.mxu0 0
        %2494 = vmatpush1.bf16.msra.mxu0 %v2472
        %2495 = vmatprep.subr.bf16.mxu0 0
        %2496 = vmatpush2.bf16.msra.mxu0 0
        %2497 = vmatprep.subr.bf16.mxu0 0
        %2498 = vmatpush2.bf16.msra.mxu0 0
        %2499 = vmatprep.subr.bf16.mxu0 0
        %2500 = vmatpush2.bf16.msra.mxu0 0
        %2501 = vmatprep.subr.bf16.mxu0 0
        %2502 = vmatpush2.bf16.msra.mxu0 0
        %2503 = vmatprep.subr.bf16.mxu0 0
        %2504 = vmatpush2.bf16.msra.mxu0 0
        %2505 = vmatprep.subr.bf16.mxu0 0
        %2506 = vmatpush2.bf16.msra.mxu0 0
        %2507 = vmatprep.subr.bf16.mxu0 0
        %2508 = vmatpush2.bf16.msra.mxu0 0
        %2509 = vmatprep.subr.bf16.mxu0 0
        %2510 = vmatpush2.bf16.msra.mxu0 0
        %2511 = vmatprep.mubr.bf16.mxu0 0
        %2512 = vmatmul.mubr.bf16.gmra.mxu0 %v2477
        %v2513 = vpop.f32.mrf.mxu0
        %v2514 = vadd.f32 %v2463, %v2513
        %v2515 = vpop.f32.mrf.mxu0
        %v2516 = vpop.f32.mrf.mxu0
        %v2517 = vpop.f32.mrf.mxu0
        %2518 = vdwg.mxu0
        %vm2519 = vcmask 80896
        %2520 = vst.msk [vmem:[%s331] sm:$0xff] %vm2519, %v2514
        %s2521 = sand.u32 %s213, 1
        %s2522 = scalar_lea.sflag [#allocation3], %s2521
        %s2523 = sand.u32 %s213, 1
        %s2524 = smul.addr %s2523, 8
        %s2525 = scalar_lea.vmem [#allocation2], %s2524
        // Predicated region
        $region53: #{tpu_custom_call.1} parent=51 // pred_check
          %p2526 = pneg %p223
        $region54: #{tpu_custom_call.1} parent=51 // pred_check_branch
          %2528 = sbr.rel (%p2526) target = $region56
        $region55: #{tpu_custom_call.1} parent=51 // pred_region
          %s2530 = ssub.s32 128, 128
          %2531 = vsyncadd %s2522, %s2530
          %s2532 = smul.addr %s22, 128
          %s2533 = scalar_lea.hbm %s8, %s2532
          %s2535 = sshll.u32 %s2525, 4
          %s2536 = int_to_ptr.vmem [resolvable:$true] %s2535
          %2538 = dma.vmem_to_hbm [thread:$0]  %s2536, 128, %s2533, %s2522
        $region56: #{tpu_custom_call.1} parent=51 // pred_fallthru
          _
      $region52: #{tpu_custom_call.1} parent=5 // pred_fallthru
        _
      %p2539 = scmp.le.s32.totalorder 2, %s17
      // Predicated region
      $region57: #{tpu_custom_call.1} parent=5 // pred_check
        %p2540 = pneg %p2539
      $region58: #{tpu_custom_call.1} parent=5 // pred_check_branch
        %2542 = sbr.rel (%p2540) target = $region60
      $region59: #{tpu_custom_call.1} parent=5 // pred_region
        %s2543 = ssub.s32 %s17, 2
        // Predicated region
        $region61: #{tpu_custom_call.1} parent=59 // pred_check
          %p2544 = pneg %p229
        $region62: #{tpu_custom_call.1} parent=59 // pred_check_branch
          %2546 = sbr.rel (%p2544) target = $region64
        $region63: #{tpu_custom_call.1} parent=59 // pred_region
          %s2547 = sand.u32 %s214, 1
          %s2548 = scalar_lea.sflag [#allocation3], %s2547
          %s2549 = sand.u32 %s214, 1
          %s2550 = smul.addr %s2549, 8
          %s2551 = scalar_lea.vmem [#allocation2], %s2550
          %2552 = dma.done %s2548, 128
        $region64: #{tpu_custom_call.1} parent=59 // pred_fallthru
          _
      $region60: #{tpu_custom_call.1} parent=5 // pred_fallthru
        _
    $region6: #{tpu_custom_call.1} parent=1 // loop_footer
      %s21 = sadd.s32 1, %s17
    $region7: #{tpu_custom_call.1} parent=1 // loop_footer_branch
      %16 = sbr.rel target = $region3
    $region8: #{tpu_custom_call.1} parent=1 // loop_exit
      _
    %2553 = vsyncpa [#allocation3], 1
    %s2554 = scalar_lea.sflag [#allocation3], 1
    %2555 = vsyncpa %s2554, 1

</llo_original>
